<compile_context>
chip_gen: v6e
topology: v6e:2x2x1
jax: 0.10.0
libtpu: 0.0.40
codegen_flags: <defaults>
</compile_context>

<pallas_src>
import functools

import jax
import jax.numpy as jnp
from jax.experimental import pallas as pl
from jax.experimental.pallas import tpu as pltpu


def mamba_scan_kernel(x_ref, wdt_ref, wbc_ref, A_ref, d_ref, bias_ref,
                      out_ref,
                      h_scr, u_scr, dy_scr, b_scr, c_scr,
                      dA_scr, dBu_scr, hall_scr, *, sub, d_tile):
    # x_ref:    (D, Lc)        input chunk for this (k, b, chunk)
    # wdt_ref:  (D, D)         folded delta projection (W_xproj[:R].T @ W_dt.T)
    # wbc_ref:  (D, 2N)        B/C projection weight (transposed)
    # A_ref:    (N, D)         precomputed A = -exp(A_logs), state-major
    # d_ref:    (1, D)         skip-connection D
    # bias_ref: (1, D)         dt bias
    # out_ref:  (D, Lc)        channel-major output chunk
    # h_scr:    (N, D)         hidden state carried across L chunks
    # u_scr:    (Lc, D)        u staging (time-major)
    # dy_scr:   (Lc, D)        delta staging, overwritten in place with y
    # b_scr/c_scr: (Lc, N)     B / C staging (time-major)
    # dA_scr/dBu_scr/hall_scr: (sub, N, Dt) per-sub-block vectorized staging
    N = A_ref.shape[0]
    D = A_ref.shape[1]
    L_c = x_ref.shape[1]

    # NOTE: the h_scr carry is only correct because the L-chunk axis is the
    # innermost, sequentially iterated ("arbitrary") grid axis and is reset at
    # program_id(2)==0.  Do not reorder grid axes or mark it parallel.
    @pl.when(pl.program_id(2) == 0)
    def _():
        h_scr[...] = jnp.zeros_like(h_scr)

    # ---------------- projection phase (MXU) ----------------
    # Single XLU transpose of the input; everything downstream is time-major
    # (lane axis = D), so scratch stores are lane-dense.
    xT = x_ref[...].astype(jnp.float32).T                                  # (Lc, D)
    u_scr[...] = xT

    dts = jnp.dot(xT, wdt_ref[...], preferred_element_type=jnp.float32)   # (Lc, D)
    dy_scr[...] = jax.nn.softplus(dts + bias_ref[...])                     # delta

    bc = jnp.dot(xT, wbc_ref[...], preferred_element_type=jnp.float32)    # (Lc, 2N)
    b_scr[...] = bc[:, :N]
    c_scr[...] = bc[:, N:2 * N]

    # ---------------- scan phase (VPU), D-tiled ----------------
    n_dt = D // d_tile
    n_blk = L_c // sub

    for ti in range(n_dt):
        dcols = pl.ds(ti * d_tile, d_tile)
        A_b = A_ref[:, dcols][None, :, :]                                  # (1, N, Dt)
        d_t = d_ref[:, dcols]                                              # (1, Dt)

        def blk_body(blk, h, dcols=dcols, A_b=A_b, d_t=d_t):               # h: (N, Dt)
            base = pl.multiple_of(blk * sub, sub)
            rows = pl.ds(base, sub)
            dl = dy_scr[rows, dcols]                                       # (sub, Dt)
            uu = u_scr[rows, dcols]                                        # (sub, Dt)
            bb = b_scr[rows, :]                                            # (sub, N)
            cc = c_scr[rows, :]                                            # (sub, N)

            # Vectorized precompute (EUP exp + relayouts OFF the serial chain).
            dA_scr[...] = jnp.exp(dl[:, None, :] * A_b)                    # (sub,N,Dt)
            dBu_scr[...] = (dl * uu)[:, None, :] * bb[:, :, None]          # (sub,N,Dt)

            # Serial chain: 2 VALU ops per h vreg per step; h streamed to VMEM.
            for j in range(sub):
                h = dA_scr[j] * h + dBu_scr[j]
                hall_scr[j] = h

            # Vectorized y for the whole sub-block (off the serial chain).
            y_blk = jnp.sum(hall_scr[...] * cc[:, :, None], axis=1) + d_t * uu
            # Alias y onto the delta rows that were just consumed.
            dy_scr[rows, dcols] = y_blk
            return h

        h_fin = jax.lax.fori_loop(0, n_blk, blk_body, h_scr[:, dcols])
        h_scr[:, dcols] = h_fin

    # Write the chunk channel-major so the wrapper returns (B, K, D, L)
    # directly with no extra HBM pass.
    out_ref[...] = dy_scr[...].T.astype(out_ref.dtype)


def mamba_scanner(xs, x_proj_weight, dt_projs_weight, dt_projs_bias,
                  A_logs, Ds, *, l_chunk=256, d_tile=512, sub=8,
                  vmem_limit_bytes=None):
    """Pallas implementation of MambaScanner.forward (force_fp32=True)."""
    B, K, D, L = xs.shape
    N = A_logs.shape[1]
    R = dt_projs_weight.shape[2]

    L_c = min(l_chunk, L)
    assert L % L_c == 0, "L must be divisible by the L chunk size"
    assert L_c == L or L_c % 128 == 0, (
        "L chunk must be a multiple of 128 lanes (or cover the full L)")
    assert L_c % sub == 0, "L chunk must be divisible by the unroll factor"

    # Pick a lane-aligned D tile for the scan phase (bounds vreg live ranges
    # at production D); fall back to the full D for small / odd sizes.
    Dt = D
    for cand in (d_tile, 512, 256, 128):
        if cand <= D and D % cand == 0 and cand % 128 == 0:
            Dt = cand
            break
    assert D % Dt == 0

    f32 = jnp.float32
    # Hoisted parameter preprocessing (done once, not per grid step).
    wT = jnp.transpose(x_proj_weight, (0, 2, 1)).astype(f32)        # (K, D, C)
    dtwT = jnp.transpose(dt_projs_weight, (0, 2, 1)).astype(f32)    # (K, R, D)
    # Fold the dt projection: dts = xT @ (W_xproj[:R].T @ W_dtproj.T).
    w_dt = jnp.einsum('kdr,kre->kde', wT[:, :, :R], dtwT)           # (K, D, D)
    w_bc = wT[:, :, R:]                                             # (K, D, 2N)
    A_nd = jnp.transpose(
        -jnp.exp(A_logs.astype(f32)).reshape(K, D, N), (0, 2, 1))   # (K, N, D)
    d_param = Ds.astype(f32).reshape(K, 1, D)                       # (K, 1, D)
    bias = dt_projs_bias.astype(f32).reshape(K, 1, D)               # (K, 1, D)

    # VMEM budget: derived from the actual footprint and the device's
    # physical VMEM (v7x has 64 MiB; v5e/v6e have 128 MiB).
    if vmem_limit_bytes is None:
        block_bytes = 2 * (2 * D * L_c) * 4                         # in/out (dbl-buf)
        param_bytes = 2 * (D * D + 3 * N * D + 2 * D) * 4
        scratch_bytes = (N * D + 2 * L_c * D + 2 * L_c * N
                         + 3 * sub * N * Dt) * 4
        try:
            phys = int(pltpu.get_tpu_info().vmem_capacity_bytes)
        except Exception:
            phys = 64 * 1024 * 1024                                 # v7x-conservative
        need = block_bytes + param_bytes + scratch_bytes + (8 << 20)
        cap = max(phys - (24 << 20), 32 << 20)
        vmem_limit_bytes = int(min(max(need, 32 << 20), cap))

    kernel = functools.partial(mamba_scan_kernel, sub=sub, d_tile=Dt)

    out = pl.pallas_call(
        kernel,
        out_shape=jax.ShapeDtypeStruct((B, K, D, L), jnp.float32),
        grid=(K, B, L // L_c),
        in_specs=[
            pl.BlockSpec((None, None, D, L_c), lambda k, b, lc: (b, k, 0, lc)),  # xs
            pl.BlockSpec((None, D, D), lambda k, b, lc: (k, 0, 0)),       # W_dt (folded)
            pl.BlockSpec((None, D, 2 * N), lambda k, b, lc: (k, 0, 0)),   # W_bc
            pl.BlockSpec((None, N, D), lambda k, b, lc: (k, 0, 0)),       # A (N, D)
            pl.BlockSpec((None, 1, D), lambda k, b, lc: (k, 0, 0)),       # Ds
            pl.BlockSpec((None, 1, D), lambda k, b, lc: (k, 0, 0)),       # dt bias
        ],
        out_specs=pl.BlockSpec((None, None, D, L_c),
                               lambda k, b, lc: (b, k, 0, lc)),
        scratch_shapes=[
            pltpu.VMEM((N, D), f32),        # h carry across L chunks
            pltpu.VMEM((L_c, D), f32),      # u      (time-major)
            pltpu.VMEM((L_c, D), f32),      # delta, reused as y (time-major)
            pltpu.VMEM((L_c, N), f32),      # B      (time-major)
            pltpu.VMEM((L_c, N), f32),      # C      (time-major)
            pltpu.VMEM((sub, N, Dt), f32),  # dA   per sub-block
            pltpu.VMEM((sub, N, Dt), f32),  # dBu  per sub-block
            pltpu.VMEM((sub, N, Dt), f32),  # h history per sub-block
        ],
        compiler_params=pltpu.CompilerParams(
            dimension_semantics=("parallel", "parallel", "arbitrary"),
            vmem_limit_bytes=vmem_limit_bytes),
    )(xs, w_dt, w_bc, A_nd, d_param, bias)

    return out  # (B, K, D, L), float32


def mamba_scanner_ref(xs, x_proj_weight, dt_projs_weight, dt_projs_bias,
                      A_logs, Ds):
    """Pure-JAX reference mirroring the PyTorch forward."""
    B, K, D, L = xs.shape
    N = A_logs.shape[1]
    R = dt_projs_weight.shape[2]

    x_dbl = jnp.einsum('bkdl,kcd->bkcl', xs, x_proj_weight)
    dts_r = x_dbl[:, :, :R]
    Bs = x_dbl[:, :, R:R + N]
    Cs = x_dbl[:, :, R + N:R + 2 * N]
    dts = jnp.einsum('bkrl,kdr->bkdl', dts_r, dt_projs_weight)

    A = -jnp.exp(A_logs).reshape(K, D, N)
    Dp = Ds.reshape(K, D)
    bias = dt_projs_bias.reshape(K, D)
    delta = jax.nn.softplus(dts + bias[None, :, :, None])
    u = xs

    def body(h, inp):
        d_t, u_t, b_t, c_t = inp          # (B,K,D) (B,K,D) (B,K,N) (B,K,N)
        dA = jnp.exp(d_t[..., None] * A[None])
        h = dA * h + (d_t * u_t)[..., None] * b_t[:, :, None, :]
        y = jnp.sum(h * c_t[:, :, None, :], axis=-1) + Dp[None] * u_t
        return h, y

    h0 = jnp.zeros((B, K, D, N), jnp.float32)
    _, ys = jax.lax.scan(
        body, h0,
        (jnp.moveaxis(delta, -1, 0), jnp.moveaxis(u, -1, 0),
         jnp.moveaxis(Bs, -1, 0), jnp.moveaxis(Cs, -1, 0)))
    return jnp.moveaxis(ys, 0, -1)        # (B, K, D, L)


if __name__ == "__main__":
    # Small shapes consistent with the module:
    #   B=2 batch, K=4 scan directions, D=8 inner dim, N=8 state dim,
    #   R=4 dt rank, L=256 sequence length (2 lane-aligned chunks of 128).
    B, K, D, N, R, L = 2, 4, 8, 8, 4, 256

    key = jax.random.PRNGKey(0)
    k1, k2, k3, k4 = jax.random.split(key, 4)

    xs = jax.random.normal(k1, (B, K, D, L), jnp.float32)
    x_proj_weight = 0.2 * jax.random.normal(k2, (K, R + 2 * N, D), jnp.float32)
    dt_projs_weight = 0.2 * jax.random.normal(k3, (K, D, R), jnp.float32)
    dt_projs_bias = 0.1 * jax.random.normal(k4, (K, D), jnp.float32)
    # Deterministic Mamba-style A / D init (S4D-real).
    A_logs = jnp.log(jnp.tile(jnp.arange(1, N + 1, dtype=jnp.float32)[None, :],
                              (K * D, 1)))
    Ds = jnp.ones((K * D,), jnp.float32) + 0.01 * jnp.arange(K * D,
                                                             dtype=jnp.float32)

    # l_chunk=128 exercises the chunked-L grid axis + h carry (L=256 -> 2
    # chunks) with a lane-aligned chunk size.
    run = jax.jit(functools.partial(mamba_scanner, l_chunk=128, sub=8))
    out = run(xs, x_proj_weight, dt_projs_weight, dt_projs_bias, A_logs, Ds)
    out = jax.block_until_ready(out)

    ref = mamba_scanner_ref(xs, x_proj_weight, dt_projs_weight, dt_projs_bias,
                            A_logs, Ds)

    assert out.shape == (B, K, D, L), out.shape
    assert out.dtype == jnp.float32, out.dtype
    max_err = float(jnp.max(jnp.abs(out - ref)))
    assert max_err < 1e-3, f"mismatch vs reference: {max_err}"

    print("KERNEL_OK")
</pallas_src>

<mosaic_0001>
module attributes {stable_mosaic.version = 11 : i64} {
  func.func @mamba_scan_kernel(%arg0: i32, %arg1: i32, %arg2: i32, %arg3: memref<1x1x8x128xf32, #tpu.memory_space<vmem>>, %arg4: memref<1x8x8xf32, #tpu.memory_space<vmem>>, %arg5: memref<1x8x16xf32, #tpu.memory_space<vmem>>, %arg6: memref<1x8x8xf32, #tpu.memory_space<vmem>>, %arg7: memref<1x1x8xf32, #tpu.memory_space<vmem>>, %arg8: memref<1x1x8xf32, #tpu.memory_space<vmem>>, %arg9: memref<1x1x8x128xf32, #tpu.memory_space<vmem>>, %arg10: memref<8x8xf32, #tpu.memory_space<vmem>>, %arg11: memref<128x8xf32, #tpu.memory_space<vmem>>, %arg12: memref<128x8xf32, #tpu.memory_space<vmem>>, %arg13: memref<128x8xf32, #tpu.memory_space<vmem>>, %arg14: memref<128x8xf32, #tpu.memory_space<vmem>>, %arg15: memref<8x8x8xf32, #tpu.memory_space<vmem>>, %arg16: memref<8x8x8xf32, #tpu.memory_space<vmem>>, %arg17: memref<8x8x8xf32, #tpu.memory_space<vmem>>) attributes {dimension_semantics = [#tpu.dimension_semantics<parallel>, #tpu.dimension_semantics<parallel>, #tpu.dimension_semantics<arbitrary>], iteration_bounds = array<i64: 4, 2, 2>, scalar_prefetch = 0 : i64, scratch_operands = 8 : i64, tpu.core_type = #tpu.core_type<tc>, window_params = [{transform_indices = @transform_0, window_bounds = array<i64: 1, 1, 8, 128>}, {transform_indices = @transform_1, window_bounds = array<i64: 1, 8, 8>}, {transform_indices = @transform_2, window_bounds = array<i64: 1, 8, 16>}, {transform_indices = @transform_3, window_bounds = array<i64: 1, 8, 8>}, {transform_indices = @transform_4, window_bounds = array<i64: 1, 1, 8>}, {transform_indices = @transform_5, window_bounds = array<i64: 1, 1, 8>}, {transform_indices = @transform_6, window_bounds = array<i64: 1, 1, 8, 128>}]} {
    %c0_i32 = arith.constant 0 : i32
    %0 = arith.cmpi eq, %arg2, %c0_i32 : i32
    %1 = arith.extui %0 : i1 to i32
    %c0_i32_0 = arith.constant 0 : i32
    %2 = arith.cmpi ne, %1, %c0_i32_0 : i32
    scf.if %2 {
      %cst_42 = arith.constant 0.000000e+00 : f32
      %50 = vector.broadcast %cst_42 : f32 to vector<8x8xf32>
      %c0_43 = arith.constant 0 : index
      %c0_44 = arith.constant 0 : index
      %51 = vector.load %arg10[%c0_43, %c0_44] : memref<8x8xf32, #tpu.memory_space<vmem>>, vector<8x8xf32>
      tpu.vector_store %arg10[%c0_43, %c0_44], %50 {strides = array<i32>} : memref<8x8xf32, #tpu.memory_space<vmem>>, vector<8x8xf32>,
    } else {
    }
    %c0 = arith.constant 0 : index
    %c0_1 = arith.constant 0 : index
    %c0_2 = arith.constant 0 : index
    %c0_3 = arith.constant 0 : index
    %3 = vector.load %arg3[%c0, %c0_1, %c0_2, %c0_3] : memref<1x1x8x128xf32, #tpu.memory_space<vmem>>, vector<1x1x8x128xf32>
    %4 = vector.shape_cast %3 : vector<1x1x8x128xf32> to vector<8x128xf32>
    %5 = tpu.transpose %4, [1, 0] : vector<8x128xf32> -> vector<128x8xf32>
    %c0_4 = arith.constant 0 : index
    %c0_5 = arith.constant 0 : index
    %6 = vector.load %arg11[%c0_4, %c0_5] : memref<128x8xf32, #tpu.memory_space<vmem>>, vector<128x8xf32>
    tpu.vector_store %arg11[%c0_4, %c0_5], %5 {strides = array<i32>} : memref<128x8xf32, #tpu.memory_space<vmem>>, vector<128x8xf32>,
    %c0_6 = arith.constant 0 : index
    %c0_7 = arith.constant 0 : index
    %c0_8 = arith.constant 0 : index
    %7 = vector.load %arg4[%c0_6, %c0_7, %c0_8] : memref<1x8x8xf32, #tpu.memory_space<vmem>>, vector<1x8x8xf32>
    %8 = vector.shape_cast %7 : vector<1x8x8xf32> to vector<8x8xf32>
    %cst = arith.constant dense<0.000000e+00> : vector<128x8xf32>
    %9 = tpu.matmul %5, %8, %cst {dimension_numbers = #tpu.dot_dimension_numbers<[1], [0], [0], [1], [0, 0, 1, 1], [], []>} : vector<128x8xf32>, vector<8x8xf32>, vector<128x8xf32> -> vector<128x8xf32>
    %c0_9 = arith.constant 0 : index
    %c0_10 = arith.constant 0 : index
    %c0_11 = arith.constant 0 : index
    %10 = vector.load %arg8[%c0_9, %c0_10, %c0_11] : memref<1x1x8xf32, #tpu.memory_space<vmem>>, vector<1x1x8xf32>
    %11 = vector.shape_cast %10 : vector<1x1x8xf32> to vector<1x8xf32>
    %12 = vector.broadcast %11 : vector<1x8xf32> to vector<128x8xf32>
    %13 = arith.addf %9, %12 : vector<128x8xf32>
    %cst_12 = arith.constant 0.000000e+00 : f32
    %14 = vector.broadcast %cst_12 : f32 to vector<128x8xf32>
    %15 = arith.maximumf %13, %14 : vector<128x8xf32>
    %16 = vector.broadcast %cst_12 : f32 to vector<128x8xf32>
    %17 = arith.subf %13, %16 : vector<128x8xf32>
    %18 = arith.cmpf one, %17, %17 : vector<128x8xf32>
    %19 = vector.broadcast %cst_12 : f32 to vector<128x8xf32>
    %20 = arith.addf %13, %19 : vector<128x8xf32>
    %21 = math.absf %17 : vector<128x8xf32>
    %cst_13 = arith.constant 0.000000e+00 : f32
    %22 = vector.broadcast %cst_13 : f32 to vector<128x8xf32>
    %23 = arith.subf %22, %21 : vector<128x8xf32>
    %24 = math.exp %23 : vector<128x8xf32>
    %25 = math.log1p %24 : vector<128x8xf32>
    %26 = arith.addf %15, %25 : vector<128x8xf32>
    %27 = arith.select %18, %20, %26 : vector<128x8xi1>, vector<128x8xf32>
    %c0_14 = arith.constant 0 : index
    %c0_15 = arith.constant 0 : index
    %28 = vector.load %arg12[%c0_14, %c0_15] : memref<128x8xf32, #tpu.memory_space<vmem>>, vector<128x8xf32>
    tpu.vector_store %arg12[%c0_14, %c0_15], %27 {strides = array<i32>} : memref<128x8xf32, #tpu.memory_space<vmem>>, vector<128x8xf32>,
    %c0_16 = arith.constant 0 : index
    %c0_17 = arith.constant 0 : index
    %c0_18 = arith.constant 0 : index
    %29 = vector.load %arg5[%c0_16, %c0_17, %c0_18] : memref<1x8x16xf32, #tpu.memory_space<vmem>>, vector<1x8x16xf32>
    %30 = vector.shape_cast %29 : vector<1x8x16xf32> to vector<8x16xf32>
    %cst_19 = arith.constant dense<0.000000e+00> : vector<128x16xf32>
    %31 = tpu.matmul %5, %30, %cst_19 {dimension_numbers = #tpu.dot_dimension_numbers<[1], [0], [0], [1], [0, 0, 1, 1], [], []>} : vector<128x8xf32>, vector<8x16xf32>, vector<128x16xf32> -> vector<128x16xf32>
    %32 = vector.extract_strided_slice %31 {offsets = [0, 0], sizes = [128, 8], strides = [1, 1]} : vector<128x16xf32> to vector<128x8xf32>
    %c0_20 = arith.constant 0 : index
    %c0_21 = arith.constant 0 : index
    %33 = vector.load %arg13[%c0_20, %c0_21] : memref<128x8xf32, #tpu.memory_space<vmem>>, vector<128x8xf32>
    tpu.vector_store %arg13[%c0_20, %c0_21], %32 {strides = array<i32>} : memref<128x8xf32, #tpu.memory_space<vmem>>, vector<128x8xf32>,
    %34 = vector.extract_strided_slice %31 {offsets = [0, 8], sizes = [128, 8], strides = [1, 1]} : vector<128x16xf32> to vector<128x8xf32>
    %c0_22 = arith.constant 0 : index
    %c0_23 = arith.constant 0 : index
    %35 = vector.load %arg14[%c0_22, %c0_23] : memref<128x8xf32, #tpu.memory_space<vmem>>, vector<128x8xf32>
    tpu.vector_store %arg14[%c0_22, %c0_23], %34 {strides = array<i32>} : memref<128x8xf32, #tpu.memory_space<vmem>>, vector<128x8xf32>,
    %c0_24 = arith.constant 0 : index
    %c0_25 = arith.constant 0 : index
    %c0_26 = arith.constant 0 : index
    %36 = vector.load %arg6[%c0_24, %c0_25, %c0_26] : memref<1x8x8xf32, #tpu.memory_space<vmem>>, vector<1x8x8xf32>
    %37 = vector.shape_cast %36 : vector<1x8x8xf32> to vector<8x8xf32>
    %38 = vector.shape_cast %37 : vector<8x8xf32> to vector<1x8x8xf32>
    %c0_27 = arith.constant 0 : index
    %c0_28 = arith.constant 0 : index
    %c0_29 = arith.constant 0 : index
    %39 = vector.load %arg7[%c0_27, %c0_28, %c0_29] : memref<1x1x8xf32, #tpu.memory_space<vmem>>, vector<1x1x8xf32>
    %40 = vector.shape_cast %39 : vector<1x1x8xf32> to vector<1x8xf32>
    %c0_30 = arith.constant 0 : index
    %c0_31 = arith.constant 0 : index
    %41 = vector.load %arg10[%c0_30, %c0_31] : memref<8x8xf32, #tpu.memory_space<vmem>>, vector<8x8xf32>
    %c0_i32_32 = arith.constant 0 : i32
    %c16_i32 = arith.constant 16 : i32
    %42 = arith.addi %c0_i32_32, %c16_i32 : i32
    %c1_i32 = arith.constant 1 : i32
    %43 = scf.for %arg18 = %c0_i32_32 to %42 step %c1_i32 iter_args(%arg19 = %41) -> (vector<8x8xf32>)  : i32 {
      %c8_i32 = arith.constant 8 : i32
      %50 = arith.muli %arg18, %c8_i32 : i32
      %51 = tpu.assume_multiple %50, 8 : i32
      %52 = arith.index_cast %51 : i32 to index
      %c0_42 = arith.constant 0 : index
      %53 = vector.load %arg12[%52, %c0_42] : memref<128x8xf32, #tpu.memory_space<vmem>>, vector<8x8xf32>
      %54 = arith.index_cast %51 : i32 to index
      %c0_43 = arith.constant 0 : index
      %55 = vector.load %arg11[%54, %c0_43] : memref<128x8xf32, #tpu.memory_space<vmem>>, vector<8x8xf32>
      %56 = arith.index_cast %51 : i32 to index
      %c0_44 = arith.constant 0 : index
      %57 = vector.load %arg13[%56, %c0_44] : memref<128x8xf32, #tpu.memory_space<vmem>>, vector<8x8xf32>
      %58 = arith.index_cast %51 : i32 to index
      %c0_45 = arith.constant 0 : index
      %59 = vector.load %arg14[%58, %c0_45] : memref<128x8xf32, #tpu.memory_space<vmem>>, vector<8x8xf32>
      %60 = vector.shape_cast %53 : vector<8x8xf32> to vector<8x1x8xf32>
      %61 = vector.broadcast %60 : vector<8x1x8xf32> to vector<8x8x8xf32>
      %62 = vector.broadcast %38 : vector<1x8x8xf32> to vector<8x8x8xf32>
      %63 = arith.mulf %61, %62 : vector<8x8x8xf32>
      %64 = math.exp %63 : vector<8x8x8xf32>
      %c0_46 = arith.constant 0 : index
      %c0_47 = arith.constant 0 : index
      %c0_48 = arith.constant 0 : index
      %65 = vector.load %arg15[%c0_46, %c0_47, %c0_48] : memref<8x8x8xf32, #tpu.memory_space<vmem>>, vector<8x8x8xf32>
      tpu.vector_store %arg15[%c0_46, %c0_47, %c0_48], %64 {strides = array<i32>} : memref<8x8x8xf32, #tpu.memory_space<vmem>>, vector<8x8x8xf32>,
      %66 = arith.mulf %53, %55 : vector<8x8xf32>
      %67 = vector.shape_cast %66 : vector<8x8xf32> to vector<8x1x8xf32>
      %68 = vector.shape_cast %57 : vector<8x8xf32> to vector<8x8x1xf32>
      %69 = vector.broadcast %67 : vector<8x1x8xf32> to vector<8x8x8xf32>
      %70 = vector.broadcast %68 : vector<8x8x1xf32> to vector<8x8x8xf32>
      %71 = arith.mulf %69, %70 : vector<8x8x8xf32>
      %c0_49 = arith.constant 0 : index
      %c0_50 = arith.constant 0 : index
      %c0_51 = arith.constant 0 : index
      %72 = vector.load %arg16[%c0_49, %c0_50, %c0_51] : memref<8x8x8xf32, #tpu.memory_space<vmem>>, vector<8x8x8xf32>
      tpu.vector_store %arg16[%c0_49, %c0_50, %c0_51], %71 {strides = array<i32>} : memref<8x8x8xf32, #tpu.memory_space<vmem>>, vector<8x8x8xf32>,
      %c0_52 = arith.constant 0 : index
      %c0_53 = arith.constant 0 : index
      %c0_54 = arith.constant 0 : index
      %73 = vector.load %arg15[%c0_52, %c0_53, %c0_54] : memref<8x8x8xf32, #tpu.memory_space<vmem>>, vector<1x8x8xf32>
      %74 = vector.shape_cast %73 : vector<1x8x8xf32> to vector<8x8xf32>
      %75 = arith.mulf %74, %arg19 : vector<8x8xf32>
      %c0_55 = arith.constant 0 : index
      %c0_56 = arith.constant 0 : index
      %c0_57 = arith.constant 0 : index
      %76 = vector.load %arg16[%c0_55, %c0_56, %c0_57] : memref<8x8x8xf32, #tpu.memory_space<vmem>>, vector<1x8x8xf32>
      %77 = vector.shape_cast %76 : vector<1x8x8xf32> to vector<8x8xf32>
      %78 = arith.addf %75, %77 : vector<8x8xf32>
      %c0_58 = arith.constant 0 : index
      %c0_59 = arith.constant 0 : index
      %c0_60 = arith.constant 0 : index
      %79 = vector.load %arg17[%c0_58, %c0_59, %c0_60] : memref<8x8x8xf32, #tpu.memory_space<vmem>>, vector<1x8x8xf32>
      %80 = vector.shape_cast %79 : vector<1x8x8xf32> to vector<8x8xf32>
      %81 = vector.shape_cast %78 : vector<8x8xf32> to vector<1x8x8xf32>
      tpu.vector_store %arg17[%c0_58, %c0_59, %c0_60], %81 {strides = array<i32>} : memref<8x8x8xf32, #tpu.memory_space<vmem>>, vector<1x8x8xf32>,
      %c1 = arith.constant 1 : index
      %c0_61 = arith.constant 0 : index
      %c0_62 = arith.constant 0 : index
      %82 = vector.load %arg15[%c1, %c0_61, %c0_62] : memref<8x8x8xf32, #tpu.memory_space<vmem>>, vector<1x8x8xf32>
      %83 = vector.shape_cast %82 : vector<1x8x8xf32> to vector<8x8xf32>
      %84 = arith.mulf %83, %78 : vector<8x8xf32>
      %c1_63 = arith.constant 1 : index
      %c0_64 = arith.constant 0 : index
      %c0_65 = arith.constant 0 : index
      %85 = vector.load %arg16[%c1_63, %c0_64, %c0_65] : memref<8x8x8xf32, #tpu.memory_space<vmem>>, vector<1x8x8xf32>
      %86 = vector.shape_cast %85 : vector<1x8x8xf32> to vector<8x8xf32>
      %87 = arith.addf %84, %86 : vector<8x8xf32>
      %c1_66 = arith.constant 1 : index
      %c0_67 = arith.constant 0 : index
      %c0_68 = arith.constant 0 : index
      %88 = vector.load %arg17[%c1_66, %c0_67, %c0_68] : memref<8x8x8xf32, #tpu.memory_space<vmem>>, vector<1x8x8xf32>
      %89 = vector.shape_cast %88 : vector<1x8x8xf32> to vector<8x8xf32>
      %90 = vector.shape_cast %87 : vector<8x8xf32> to vector<1x8x8xf32>
      tpu.vector_store %arg17[%c1_66, %c0_67, %c0_68], %90 {strides = array<i32>} : memref<8x8x8xf32, #tpu.memory_space<vmem>>, vector<1x8x8xf32>,
      %c2 = arith.constant 2 : index
      %c0_69 = arith.constant 0 : index
      %c0_70 = arith.constant 0 : index
      %91 = vector.load %arg15[%c2, %c0_69, %c0_70] : memref<8x8x8xf32, #tpu.memory_space<vmem>>, vector<1x8x8xf32>
      %92 = vector.shape_cast %91 : vector<1x8x8xf32> to vector<8x8xf32>
      %93 = arith.mulf %92, %87 : vector<8x8xf32>
      %c2_71 = arith.constant 2 : index
      %c0_72 = arith.constant 0 : index
      %c0_73 = arith.constant 0 : index
      %94 = vector.load %arg16[%c2_71, %c0_72, %c0_73] : memref<8x8x8xf32, #tpu.memory_space<vmem>>, vector<1x8x8xf32>
      %95 = vector.shape_cast %94 : vector<1x8x8xf32> to vector<8x8xf32>
      %96 = arith.addf %93, %95 : vector<8x8xf32>
      %c2_74 = arith.constant 2 : index
      %c0_75 = arith.constant 0 : index
      %c0_76 = arith.constant 0 : index
      %97 = vector.load %arg17[%c2_74, %c0_75, %c0_76] : memref<8x8x8xf32, #tpu.memory_space<vmem>>, vector<1x8x8xf32>
      %98 = vector.shape_cast %97 : vector<1x8x8xf32> to vector<8x8xf32>
      %99 = vector.shape_cast %96 : vector<8x8xf32> to vector<1x8x8xf32>
      tpu.vector_store %arg17[%c2_74, %c0_75, %c0_76], %99 {strides = array<i32>} : memref<8x8x8xf32, #tpu.memory_space<vmem>>, vector<1x8x8xf32>,
      %c3 = arith.constant 3 : index
      %c0_77 = arith.constant 0 : index
      %c0_78 = arith.constant 0 : index
      %100 = vector.load %arg15[%c3, %c0_77, %c0_78] : memref<8x8x8xf32, #tpu.memory_space<vmem>>, vector<1x8x8xf32>
      %101 = vector.shape_cast %100 : vector<1x8x8xf32> to vector<8x8xf32>
      %102 = arith.mulf %101, %96 : vector<8x8xf32>
      %c3_79 = arith.constant 3 : index
      %c0_80 = arith.constant 0 : index
      %c0_81 = arith.constant 0 : index
      %103 = vector.load %arg16[%c3_79, %c0_80, %c0_81] : memref<8x8x8xf32, #tpu.memory_space<vmem>>, vector<1x8x8xf32>
      %104 = vector.shape_cast %103 : vector<1x8x8xf32> to vector<8x8xf32>
      %105 = arith.addf %102, %104 : vector<8x8xf32>
      %c3_82 = arith.constant 3 : index
      %c0_83 = arith.constant 0 : index
      %c0_84 = arith.constant 0 : index
      %106 = vector.load %arg17[%c3_82, %c0_83, %c0_84] : memref<8x8x8xf32, #tpu.memory_space<vmem>>, vector<1x8x8xf32>
      %107 = vector.shape_cast %106 : vector<1x8x8xf32> to vector<8x8xf32>
      %108 = vector.shape_cast %105 : vector<8x8xf32> to vector<1x8x8xf32>
      tpu.vector_store %arg17[%c3_82, %c0_83, %c0_84], %108 {strides = array<i32>} : memref<8x8x8xf32, #tpu.memory_space<vmem>>, vector<1x8x8xf32>,
      %c4 = arith.constant 4 : index
      %c0_85 = arith.constant 0 : index
      %c0_86 = arith.constant 0 : index
      %109 = vector.load %arg15[%c4, %c0_85, %c0_86] : memref<8x8x8xf32, #tpu.memory_space<vmem>>, vector<1x8x8xf32>
      %110 = vector.shape_cast %109 : vector<1x8x8xf32> to vector<8x8xf32>
      %111 = arith.mulf %110, %105 : vector<8x8xf32>
      %c4_87 = arith.constant 4 : index
      %c0_88 = arith.constant 0 : index
      %c0_89 = arith.constant 0 : index
      %112 = vector.load %arg16[%c4_87, %c0_88, %c0_89] : memref<8x8x8xf32, #tpu.memory_space<vmem>>, vector<1x8x8xf32>
      %113 = vector.shape_cast %112 : vector<1x8x8xf32> to vector<8x8xf32>
      %114 = arith.addf %111, %113 : vector<8x8xf32>
      %c4_90 = arith.constant 4 : index
      %c0_91 = arith.constant 0 : index
      %c0_92 = arith.constant 0 : index
      %115 = vector.load %arg17[%c4_90, %c0_91, %c0_92] : memref<8x8x8xf32, #tpu.memory_space<vmem>>, vector<1x8x8xf32>
      %116 = vector.shape_cast %115 : vector<1x8x8xf32> to vector<8x8xf32>
      %117 = vector.shape_cast %114 : vector<8x8xf32> to vector<1x8x8xf32>
      tpu.vector_store %arg17[%c4_90, %c0_91, %c0_92], %117 {strides = array<i32>} : memref<8x8x8xf32, #tpu.memory_space<vmem>>, vector<1x8x8xf32>,
      %c5 = arith.constant 5 : index
      %c0_93 = arith.constant 0 : index
      %c0_94 = arith.constant 0 : index
      %118 = vector.load %arg15[%c5, %c0_93, %c0_94] : memref<8x8x8xf32, #tpu.memory_space<vmem>>, vector<1x8x8xf32>
      %119 = vector.shape_cast %118 : vector<1x8x8xf32> to vector<8x8xf32>
      %120 = arith.mulf %119, %114 : vector<8x8xf32>
      %c5_95 = arith.constant 5 : index
      %c0_96 = arith.constant 0 : index
      %c0_97 = arith.constant 0 : index
      %121 = vector.load %arg16[%c5_95, %c0_96, %c0_97] : memref<8x8x8xf32, #tpu.memory_space<vmem>>, vector<1x8x8xf32>
      %122 = vector.shape_cast %121 : vector<1x8x8xf32> to vector<8x8xf32>
      %123 = arith.addf %120, %122 : vector<8x8xf32>
      %c5_98 = arith.constant 5 : index
      %c0_99 = arith.constant 0 : index
      %c0_100 = arith.constant 0 : index
      %124 = vector.load %arg17[%c5_98, %c0_99, %c0_100] : memref<8x8x8xf32, #tpu.memory_space<vmem>>, vector<1x8x8xf32>
      %125 = vector.shape_cast %124 : vector<1x8x8xf32> to vector<8x8xf32>
      %126 = vector.shape_cast %123 : vector<8x8xf32> to vector<1x8x8xf32>
      tpu.vector_store %arg17[%c5_98, %c0_99, %c0_100], %126 {strides = array<i32>} : memref<8x8x8xf32, #tpu.memory_space<vmem>>, vector<1x8x8xf32>,
      %c6 = arith.constant 6 : index
      %c0_101 = arith.constant 0 : index
      %c0_102 = arith.constant 0 : index
      %127 = vector.load %arg15[%c6, %c0_101, %c0_102] : memref<8x8x8xf32, #tpu.memory_space<vmem>>, vector<1x8x8xf32>
      %128 = vector.shape_cast %127 : vector<1x8x8xf32> to vector<8x8xf32>
      %129 = arith.mulf %128, %123 : vector<8x8xf32>
      %c6_103 = arith.constant 6 : index
      %c0_104 = arith.constant 0 : index
      %c0_105 = arith.constant 0 : index
      %130 = vector.load %arg16[%c6_103, %c0_104, %c0_105] : memref<8x8x8xf32, #tpu.memory_space<vmem>>, vector<1x8x8xf32>
      %131 = vector.shape_cast %130 : vector<1x8x8xf32> to vector<8x8xf32>
      %132 = arith.addf %129, %131 : vector<8x8xf32>
      %c6_106 = arith.constant 6 : index
      %c0_107 = arith.constant 0 : index
      %c0_108 = arith.constant 0 : index
      %133 = vector.load %arg17[%c6_106, %c0_107, %c0_108] : memref<8x8x8xf32, #tpu.memory_space<vmem>>, vector<1x8x8xf32>
      %134 = vector.shape_cast %133 : vector<1x8x8xf32> to vector<8x8xf32>
      %135 = vector.shape_cast %132 : vector<8x8xf32> to vector<1x8x8xf32>
      tpu.vector_store %arg17[%c6_106, %c0_107, %c0_108], %135 {strides = array<i32>} : memref<8x8x8xf32, #tpu.memory_space<vmem>>, vector<1x8x8xf32>,
      %c7 = arith.constant 7 : index
      %c0_109 = arith.constant 0 : index
      %c0_110 = arith.constant 0 : index
      %136 = vector.load %arg15[%c7, %c0_109, %c0_110] : memref<8x8x8xf32, #tpu.memory_space<vmem>>, vector<1x8x8xf32>
      %137 = vector.shape_cast %136 : vector<1x8x8xf32> to vector<8x8xf32>
      %138 = arith.mulf %137, %132 : vector<8x8xf32>
      %c7_111 = arith.constant 7 : index
      %c0_112 = arith.constant 0 : index
      %c0_113 = arith.constant 0 : index
      %139 = vector.load %arg16[%c7_111, %c0_112, %c0_113] : memref<8x8x8xf32, #tpu.memory_space<vmem>>, vector<1x8x8xf32>
      %140 = vector.shape_cast %139 : vector<1x8x8xf32> to vector<8x8xf32>
      %141 = arith.addf %138, %140 : vector<8x8xf32>
      %c7_114 = arith.constant 7 : index
      %c0_115 = arith.constant 0 : index
      %c0_116 = arith.constant 0 : index
      %142 = vector.load %arg17[%c7_114, %c0_115, %c0_116] : memref<8x8x8xf32, #tpu.memory_space<vmem>>, vector<1x8x8xf32>
      %143 = vector.shape_cast %142 : vector<1x8x8xf32> to vector<8x8xf32>
      %144 = vector.shape_cast %141 : vector<8x8xf32> to vector<1x8x8xf32>
      tpu.vector_store %arg17[%c7_114, %c0_115, %c0_116], %144 {strides = array<i32>} : memref<8x8x8xf32, #tpu.memory_space<vmem>>, vector<1x8x8xf32>,
      %c0_117 = arith.constant 0 : index
      %c0_118 = arith.constant 0 : index
      %c0_119 = arith.constant 0 : index
      %145 = vector.load %arg17[%c0_117, %c0_118, %c0_119] : memref<8x8x8xf32, #tpu.memory_space<vmem>>, vector<8x8x8xf32>
      %146 = vector.shape_cast %59 : vector<8x8xf32> to vector<8x8x1xf32>
      %147 = vector.broadcast %146 : vector<8x8x1xf32> to vector<8x8x8xf32>
      %148 = arith.mulf %145, %147 : vector<8x8x8xf32>
      %cst_120 = arith.constant dense<0.000000e+00> : vector<8x8xf32>
      %149 = vector.multi_reduction <add>, %148, %cst_120 [1] : vector<8x8x8xf32> to vector<8x8xf32>
      %150 = vector.broadcast %40 : vector<1x8xf32> to vector<8x8xf32>
      %151 = arith.mulf %150, %55 : vector<8x8xf32>
      %152 = arith.addf %149, %151 : vector<8x8xf32>
      %153 = arith.index_cast %51 : i32 to index
      %c0_121 = arith.constant 0 : index
      %154 = vector.load %arg12[%153, %c0_121] : memref<128x8xf32, #tpu.memory_space<vmem>>, vector<8x8xf32>
      tpu.vector_store %arg12[%153, %c0_121], %152 {strides = array<i32>} : memref<128x8xf32, #tpu.memory_space<vmem>>, vector<8x8xf32>,
      scf.yield %141 : vector<8x8xf32>
    }
    %c16_i32_33 = arith.constant 16 : i32
    %c0_34 = arith.constant 0 : index
    %c0_35 = arith.constant 0 : index
    %44 = vector.load %arg10[%c0_34, %c0_35] : memref<8x8xf32, #tpu.memory_space<vmem>>, vector<8x8xf32>
    tpu.vector_store %arg10[%c0_34, %c0_35], %43 {strides = array<i32>} : memref<8x8xf32, #tpu.memory_space<vmem>>, vector<8x8xf32>,
    %c0_36 = arith.constant 0 : index
    %c0_37 = arith.constant 0 : index
    %45 = vector.load %arg12[%c0_36, %c0_37] : memref<128x8xf32, #tpu.memory_space<vmem>>, vector<128x8xf32>
    %46 = tpu.transpose %45, [1, 0] : vector<128x8xf32> -> vector<8x128xf32>
    %c0_38 = arith.constant 0 : index
    %c0_39 = arith.constant 0 : index
    %c0_40 = arith.constant 0 : index
    %c0_41 = arith.constant 0 : index
    %47 = vector.load %arg9[%c0_38, %c0_39, %c0_40, %c0_41] : memref<1x1x8x128xf32, #tpu.memory_space<vmem>>, vector<1x1x8x128xf32>
    %48 = vector.shape_cast %47 : vector<1x1x8x128xf32> to vector<8x128xf32>
    %49 = vector.shape_cast %46 : vector<8x128xf32> to vector<1x1x8x128xf32>
    tpu.vector_store %arg9[%c0_38, %c0_39, %c0_40, %c0_41], %49 {strides = array<i32>} : memref<1x1x8x128xf32, #tpu.memory_space<vmem>>, vector<1x1x8x128xf32>,
    return
  }
  func.func @transform_0(%arg0: i32, %arg1: i32, %arg2: i32) -> (i32, i32, i32, i32) {
    %c0_i32 = arith.constant 0 : i32
    %c0_i32_0 = arith.constant 0 : i32
    return %arg1, %arg0, %c0_i32, %arg2 : i32, i32, i32, i32
  }
  func.func @transform_1(%arg0: i32, %arg1: i32, %arg2: i32) -> (i32, i32, i32) {
    %c0_i32 = arith.constant 0 : i32
    %c0_i32_0 = arith.constant 0 : i32
    %c0_i32_1 = arith.constant 0 : i32
    return %arg0, %c0_i32, %c0_i32_0 : i32, i32, i32
  }
  func.func @transform_2(%arg0: i32, %arg1: i32, %arg2: i32) -> (i32, i32, i32) {
    %c0_i32 = arith.constant 0 : i32
    %c0_i32_0 = arith.constant 0 : i32
    %c0_i32_1 = arith.constant 0 : i32
    return %arg0, %c0_i32, %c0_i32_0 : i32, i32, i32
  }
  func.func @transform_3(%arg0: i32, %arg1: i32, %arg2: i32) -> (i32, i32, i32) {
    %c0_i32 = arith.constant 0 : i32
    %c0_i32_0 = arith.constant 0 : i32
    %c0_i32_1 = arith.constant 0 : i32
    return %arg0, %c0_i32, %c0_i32_0 : i32, i32, i32
  }
  func.func @transform_4(%arg0: i32, %arg1: i32, %arg2: i32) -> (i32, i32, i32) {
    %c0_i32 = arith.constant 0 : i32
    %c0_i32_0 = arith.constant 0 : i32
    %c0_i32_1 = arith.constant 0 : i32
    return %arg0, %c0_i32, %c0_i32_0 : i32, i32, i32
  }
  func.func @transform_5(%arg0: i32, %arg1: i32, %arg2: i32) -> (i32, i32, i32) {
    %c0_i32 = arith.constant 0 : i32
    %c0_i32_0 = arith.constant 0 : i32
    %c0_i32_1 = arith.constant 0 : i32
    return %arg0, %c0_i32, %c0_i32_0 : i32, i32, i32
  }
  func.func @transform_6(%arg0: i32, %arg1: i32, %arg2: i32) -> (i32, i32, i32, i32) {
    %c0_i32 = arith.constant 0 : i32
    %c0_i32_0 = arith.constant 0 : i32
    return %arg1, %arg0, %c0_i32, %arg2 : i32, i32, i32, i32
  }
}

</mosaic_0001>

<llo_original>
// kernel: mamba_scanner.1
$region0: #{mamba_scanner.1}
  #allocation0 [shape = 'u32[]', space=smem, size = 0x4, offset = 0x4, fixed_abs, tag = 'smem constant byte address 0x4 - core index']
  #allocation1 [shape = 'u32[144,128]{1,0:T(1,128)}', space=vmem, size = 0x12000, scoped, tag = 'internal scratch']
  #allocation2 [shape = 'f32[8,8]{1,0:T(8,128)}', space=vmem, size = 0x1000, scoped, tag = 'scratch operand']
  #allocation3 [shape = 'f32[128,8]{1,0:T(8,128)}', space=vmem, size = 0x10000, scoped, tag = 'scratch operand']
  #allocation4 [shape = 'f32[128,8]{1,0:T(8,128)}', space=vmem, size = 0x10000, scoped, tag = 'scratch operand']
  #allocation5 [shape = 'f32[128,8]{1,0:T(8,128)}', space=vmem, size = 0x10000, scoped, tag = 'scratch operand']
  #allocation6 [shape = 'f32[128,8]{1,0:T(8,128)}', space=vmem, size = 0x10000, scoped, tag = 'scratch operand']
  #allocation7 [shape = 'f32[8,8,8]{2,1,0:T(8,128)}', space=vmem, size = 0x8000, scoped, tag = 'scratch operand']
  #allocation8 [shape = 'f32[8,8,8]{2,1,0:T(8,128)}', space=vmem, size = 0x8000, scoped, tag = 'scratch operand']
  #allocation9 [shape = 'f32[8,8,8]{2,1,0:T(8,128)}', space=vmem, size = 0x8000, scoped, tag = 'scratch operand']
  %s0 = inlined_call_operand.vmem [shape: f32[2,4,8,256], index: 0, kind: input, shape index: {}]
  %s1 = inlined_call_operand.vmem [shape: f32[4,8,8], index: 1, kind: input, shape index: {}]
  %s2 = inlined_call_operand.vmem [shape: f32[4,8,16], index: 2, kind: input, shape index: {}]
  %s3 = inlined_call_operand.vmem [shape: f32[4,8,8], index: 3, kind: input, shape index: {}]
  %s4 = inlined_call_operand.vmem [shape: f32[4,1,8], index: 4, kind: input, shape index: {}]
  %s5 = inlined_call_operand.vmem [shape: f32[4,1,8], index: 5, kind: input, shape index: {}]
  %s6 = inlined_call_operand.hbm [shape: f32[2,4,8,256], index: 6, kind: output, shape index: {}]
  %s7 = sld [smem:[#allocation0]]
  $region68: #{mamba_scanner.1} parent=0
    _
  %s9 = ssub.s32 1, %s7
  %s10 = scalar_select 0, %s9, %s7
  $region1: #{mamba_scanner.1} parent=0
    #allocation10 [shape = 'u8[8192]{0}', space=vmem, size = 0x2000, scoped, tag = 'output window, operand 0']
    #allocation11 [shape = 's32[2]{0}', space=sflag, size = 0x8, scoped, tag = 'scoped memory for mamba_scanner.1']
    %11 = vsyncpa [#allocation11], 0
    %s12 = scalar_lea.sflag [#allocation11], 1
    %13 = vsyncpa %s12, 0
    loop: start=0, step=1, limit=18
    $region2: #{mamba_scanner.1} parent=1 // loop_pre_header
      _
    $region3: #{mamba_scanner.1} parent=1 // loop_header
      %s15 = sphi 0, %s19
      %p16 = scmp.ge.s32.totalorder %s15, 18
      %s22 = sphi 0, %s41
      %s23 = sphi 0, %s37
      %s24 = sphi 0, %s33
      %s25 = sphi 0, %s22
      %s26 = sphi 0, %s23
      %s27 = sphi 0, %s24
      %s28 = sphi 0, %s25
      %s29 = sphi 0, %s26
      %s30 = sphi 0, %s27
      %s48 = sphi 0, %s50
      %s51 = sphi 0, %s48
      %s52 = sphi 0, %s51
      %s68 = sphi 0, %s52
      %s74 = sphi 0, %s76
      %s77 = sphi 0, %s74
      %s78 = sphi 0, %s77
      %s94 = sphi 0, %s78
      %s100 = sphi 0, %s102
      %s103 = sphi 0, %s100
      %s104 = sphi 0, %s103
      %s120 = sphi 0, %s104
      %s126 = sphi 0, %s128
      %s129 = sphi 0, %s126
      %s130 = sphi 0, %s129
      %s146 = sphi 0, %s130
      %s152 = sphi 0, %s154
      %s155 = sphi 0, %s152
      %s156 = sphi 0, %s155
      %s172 = sphi 0, %s156
      %s178 = sphi 0, %s180
      %s181 = sphi 0, %s178
      %s182 = sphi 0, %s181
      %s198 = sphi 0, %s182
      %s208 = sphi 0, %s210
      %s211 = sphi 0, %s208
      %s212 = sphi 0, %s211
      %s228 = sphi 0, %s212
    $region4: #{mamba_scanner.1} parent=1 // loop_header_branch
      %18 = sbr.rel (%p16) target = $region8
    $region5: #{mamba_scanner.1} parent=1 // loop_body
      %s20 = ssub.s32 %s15, 1
      %s21 = ssub.s32 %s15, 2
      %s31 = sadd.s32 1, %s24
      %p32 = scmp.ge.s32.totalorder %s31, 2
      %s33 = scalar_select %p32, 0, %s31
      %s34 = sadd.s32 1, %s23
      %s35 = scalar_select %p32, %s34, %s23
      %p36 = scmp.ge.s32.totalorder %s35, 2
      %s37 = scalar_select %p36, 0, %s35
      %s38 = sadd.s32 1, %s22
      %s39 = scalar_select %p36, %s38, %s22
      %p40 = scmp.ge.s32.totalorder %s39, 4
      %s41 = scalar_select %p40, 0, %s39
      %s42 = ssub.s32 %s23, %s37
      %s43 = ssub.s32 %s22, %s41
      %s44 = sor.u32 %s42, %s43
      %s45 = ssub.s32 %s24, %s33
      %s46 = sor.u32 %s44, %s45
      %p47 = scmp.eq.s32.totalorder %s46, 0
      %s49 = sadd.s32 %s48, 1
      %s50 = scalar_select %p47, %s48, %s49
      %p53 = pneg %p47
      %p54 = scmp.eq.s32.totalorder %s15, 15
      %p55 = por %p53, %p54
      %p56 = scmp.ne.s32.totalorder %s48, %s51
      %p57 = scmp.eq.s32.totalorder %s15, 0
      %p58 = por %p56, %p57
      %p59 = scmp.ne.s32.totalorder %s48, %s51
      %p60 = scmp.eq.s32.totalorder %s20, 15
      %p61 = por %p59, %p60
      %p62 = scmp.ne.s32.totalorder %s51, %s52
      %p63 = scmp.eq.s32.totalorder %s20, 0
      %p64 = por %p62, %p63
      %p65 = scmp.ne.s32.totalorder %s51, %s52
      %p66 = scmp.eq.s32.totalorder %s21, 15
      %p67 = por %p65, %p66
      %p69 = scmp.ne.s32.totalorder %s52, %s68
      %p70 = scmp.eq.s32.totalorder %s21, 0
      %p71 = por %p69, %p70
      %s72 = ssub.s32 %s22, %s41
      %p73 = scmp.eq.s32.totalorder %s72, 0
      %s75 = sadd.s32 %s74, 1
      %s76 = scalar_select %p73, %s74, %s75
      %p79 = pneg %p73
      %p80 = scmp.eq.s32.totalorder %s15, 15
      %p81 = por %p79, %p80
      %p82 = scmp.ne.s32.totalorder %s74, %s77
      %p83 = scmp.eq.s32.totalorder %s15, 0
      %p84 = por %p82, %p83
      %p85 = scmp.ne.s32.totalorder %s74, %s77
      %p86 = scmp.eq.s32.totalorder %s20, 15
      %p87 = por %p85, %p86
      %p88 = scmp.ne.s32.totalorder %s77, %s78
      %p89 = scmp.eq.s32.totalorder %s20, 0
      %p90 = por %p88, %p89
      %p91 = scmp.ne.s32.totalorder %s77, %s78
      %p92 = scmp.eq.s32.totalorder %s21, 15
      %p93 = por %p91, %p92
      %p95 = scmp.ne.s32.totalorder %s78, %s94
      %p96 = scmp.eq.s32.totalorder %s21, 0
      %p97 = por %p95, %p96
      %s98 = ssub.s32 %s22, %s41
      %p99 = scmp.eq.s32.totalorder %s98, 0
      %s101 = sadd.s32 %s100, 1
      %s102 = scalar_select %p99, %s100, %s101
      %p105 = pneg %p99
      %p106 = scmp.eq.s32.totalorder %s15, 15
      %p107 = por %p105, %p106
      %p108 = scmp.ne.s32.totalorder %s100, %s103
      %p109 = scmp.eq.s32.totalorder %s15, 0
      %p110 = por %p108, %p109
      %p111 = scmp.ne.s32.totalorder %s100, %s103
      %p112 = scmp.eq.s32.totalorder %s20, 15
      %p113 = por %p111, %p112
      %p114 = scmp.ne.s32.totalorder %s103, %s104
      %p115 = scmp.eq.s32.totalorder %s20, 0
      %p116 = por %p114, %p115
      %p117 = scmp.ne.s32.totalorder %s103, %s104
      %p118 = scmp.eq.s32.totalorder %s21, 15
      %p119 = por %p117, %p118
      %p121 = scmp.ne.s32.totalorder %s104, %s120
      %p122 = scmp.eq.s32.totalorder %s21, 0
      %p123 = por %p121, %p122
      %s124 = ssub.s32 %s22, %s41
      %p125 = scmp.eq.s32.totalorder %s124, 0
      %s127 = sadd.s32 %s126, 1
      %s128 = scalar_select %p125, %s126, %s127
      %p131 = pneg %p125
      %p132 = scmp.eq.s32.totalorder %s15, 15
      %p133 = por %p131, %p132
      %p134 = scmp.ne.s32.totalorder %s126, %s129
      %p135 = scmp.eq.s32.totalorder %s15, 0
      %p136 = por %p134, %p135
      %p137 = scmp.ne.s32.totalorder %s126, %s129
      %p138 = scmp.eq.s32.totalorder %s20, 15
      %p139 = por %p137, %p138
      %p140 = scmp.ne.s32.totalorder %s129, %s130
      %p141 = scmp.eq.s32.totalorder %s20, 0
      %p142 = por %p140, %p141
      %p143 = scmp.ne.s32.totalorder %s129, %s130
      %p144 = scmp.eq.s32.totalorder %s21, 15
      %p145 = por %p143, %p144
      %p147 = scmp.ne.s32.totalorder %s130, %s146
      %p148 = scmp.eq.s32.totalorder %s21, 0
      %p149 = por %p147, %p148
      %s150 = ssub.s32 %s22, %s41
      %p151 = scmp.eq.s32.totalorder %s150, 0
      %s153 = sadd.s32 %s152, 1
      %s154 = scalar_select %p151, %s152, %s153
      %p157 = pneg %p151
      %p158 = scmp.eq.s32.totalorder %s15, 15
      %p159 = por %p157, %p158
      %p160 = scmp.ne.s32.totalorder %s152, %s155
      %p161 = scmp.eq.s32.totalorder %s15, 0
      %p162 = por %p160, %p161
      %p163 = scmp.ne.s32.totalorder %s152, %s155
      %p164 = scmp.eq.s32.totalorder %s20, 15
      %p165 = por %p163, %p164
      %p166 = scmp.ne.s32.totalorder %s155, %s156
      %p167 = scmp.eq.s32.totalorder %s20, 0
      %p168 = por %p166, %p167
      %p169 = scmp.ne.s32.totalorder %s155, %s156
      %p170 = scmp.eq.s32.totalorder %s21, 15
      %p171 = por %p169, %p170
      %p173 = scmp.ne.s32.totalorder %s156, %s172
      %p174 = scmp.eq.s32.totalorder %s21, 0
      %p175 = por %p173, %p174
      %s176 = ssub.s32 %s22, %s41
      %p177 = scmp.eq.s32.totalorder %s176, 0
      %s179 = sadd.s32 %s178, 1
      %s180 = scalar_select %p177, %s178, %s179
      %p183 = pneg %p177
      %p184 = scmp.eq.s32.totalorder %s15, 15
      %p185 = por %p183, %p184
      %p186 = scmp.ne.s32.totalorder %s178, %s181
      %p187 = scmp.eq.s32.totalorder %s15, 0
      %p188 = por %p186, %p187
      %p189 = scmp.ne.s32.totalorder %s178, %s181
      %p190 = scmp.eq.s32.totalorder %s20, 15
      %p191 = por %p189, %p190
      %p192 = scmp.ne.s32.totalorder %s181, %s182
      %p193 = scmp.eq.s32.totalorder %s20, 0
      %p194 = por %p192, %p193
      %p195 = scmp.ne.s32.totalorder %s181, %s182
      %p196 = scmp.eq.s32.totalorder %s21, 15
      %p197 = por %p195, %p196
      %p199 = scmp.ne.s32.totalorder %s182, %s198
      %p200 = scmp.eq.s32.totalorder %s21, 0
      %p201 = por %p199, %p200
      %s202 = ssub.s32 %s23, %s37
      %s203 = ssub.s32 %s22, %s41
      %s204 = sor.u32 %s202, %s203
      %s205 = ssub.s32 %s24, %s33
      %s206 = sor.u32 %s204, %s205
      %p207 = scmp.eq.s32.totalorder %s206, 0
      %s209 = sadd.s32 %s208, 1
      %s210 = scalar_select %p207, %s208, %s209
      %p213 = pneg %p207
      %p214 = scmp.eq.s32.totalorder %s15, 15
      %p215 = por %p213, %p214
      %p216 = scmp.ne.s32.totalorder %s208, %s211
      %p217 = scmp.eq.s32.totalorder %s15, 0
      %p218 = por %p216, %p217
      %p219 = scmp.ne.s32.totalorder %s208, %s211
      %p220 = scmp.eq.s32.totalorder %s20, 15
      %p221 = por %p219, %p220
      %p222 = scmp.ne.s32.totalorder %s211, %s212
      %p223 = scmp.eq.s32.totalorder %s20, 0
      %p224 = por %p222, %p223
      %p225 = scmp.ne.s32.totalorder %s211, %s212
      %p226 = scmp.eq.s32.totalorder %s21, 15
      %p227 = por %p225, %p226
      %p229 = scmp.ne.s32.totalorder %s212, %s228
      %p230 = scmp.eq.s32.totalorder %s21, 0
      %p231 = por %p229, %p230
      %p232 = scmp.le.s32.totalorder 1, %s15
      %p233 = scmp.lt.s32.totalorder %s15, 17
      %p234 = pnand %p232, %p233
      %p235 = pneg %p234
      // Predicated region
      $region9: #{mamba_scanner.1} parent=5 // pred_check
        _
      $region10: #{mamba_scanner.1} parent=5 // pred_check_branch
        %237 = sbr.rel (%p234) target = $region12
      $region11: #{mamba_scanner.1} parent=5 // pred_region
        %s238 = ssub.s32 %s15, 1
      $region12: #{mamba_scanner.1} parent=5 // pred_fallthru
        _
      %p239 = scmp.lt.s32.totalorder %s15, 16
      // Predicated region
      $region13: #{mamba_scanner.1} parent=5 // pred_check
        %p240 = pneg %p239
      $region14: #{mamba_scanner.1} parent=5 // pred_check_branch
        %242 = sbr.rel (%p240) target = $region16
      $region15: #{mamba_scanner.1} parent=5 // pred_region
        // Predicated region
        $region17: #{mamba_scanner.1} parent=15 // pred_check
          %p243 = pneg %p58
        $region18: #{mamba_scanner.1} parent=15 // pred_check_branch
          %245 = sbr.rel (%p243) target = $region20
        $region19: #{mamba_scanner.1} parent=15 // pred_region
          %p246 = scmp.lt.s32.totalorder %s23, 1
          %s247 = scalar_select %p246, %s23, 1
          %p248 = scmp.lt.s32.totalorder %s22, 3
          %s249 = scalar_select %p248, %s22, 3
          %p250 = scmp.lt.s32.totalorder %s24, 1
          %s251 = scalar_select %p250, %s24, 1
          %s252 = smul.addr %s249, 2
          %s253 = sadd.s32 %s251, %s252
          %s254 = smul.addr %s247, 8
          %s255 = sadd.s32 %s253, %s254
          %s256 = smul.addr %s255, 8
          %s257 = scalar_lea.vmem %s0, %s256
        $region20: #{mamba_scanner.1} parent=15 // pred_fallthru
          _
        // Predicated region
        $region21: #{mamba_scanner.1} parent=15 // pred_check
          %p258 = pneg %p84
        $region22: #{mamba_scanner.1} parent=15 // pred_check_branch
          %260 = sbr.rel (%p258) target = $region24
        $region23: #{mamba_scanner.1} parent=15 // pred_region
          %p261 = scmp.lt.s32.totalorder %s22, 3
          %s262 = scalar_select %p261, %s22, 3
          %s263 = smul.addr %s262, 8
          %s264 = scalar_lea.vmem %s1, %s263
        $region24: #{mamba_scanner.1} parent=15 // pred_fallthru
          _
        // Predicated region
        $region25: #{mamba_scanner.1} parent=15 // pred_check
          %p265 = pneg %p110
        $region26: #{mamba_scanner.1} parent=15 // pred_check_branch
          %267 = sbr.rel (%p265) target = $region28
        $region27: #{mamba_scanner.1} parent=15 // pred_region
          %p268 = scmp.lt.s32.totalorder %s22, 3
          %s269 = scalar_select %p268, %s22, 3
          %s270 = smul.addr %s269, 8
          %s271 = scalar_lea.vmem %s2, %s270
        $region28: #{mamba_scanner.1} parent=15 // pred_fallthru
          _
        // Predicated region
        $region29: #{mamba_scanner.1} parent=15 // pred_check
          %p272 = pneg %p136
        $region30: #{mamba_scanner.1} parent=15 // pred_check_branch
          %274 = sbr.rel (%p272) target = $region32
        $region31: #{mamba_scanner.1} parent=15 // pred_region
          %p275 = scmp.lt.s32.totalorder %s22, 3
          %s276 = scalar_select %p275, %s22, 3
          %s277 = smul.addr %s276, 8
          %s278 = scalar_lea.vmem %s3, %s277
        $region32: #{mamba_scanner.1} parent=15 // pred_fallthru
          _
        // Predicated region
        $region33: #{mamba_scanner.1} parent=15 // pred_check
          %p279 = pneg %p162
        $region34: #{mamba_scanner.1} parent=15 // pred_check_branch
          %281 = sbr.rel (%p279) target = $region36
        $region35: #{mamba_scanner.1} parent=15 // pred_region
          %p282 = scmp.lt.s32.totalorder %s22, 3
          %s283 = scalar_select %p282, %s22, 3
          %s284 = scalar_lea.vmem %s4, %s283
        $region36: #{mamba_scanner.1} parent=15 // pred_fallthru
          _
        // Predicated region
        $region37: #{mamba_scanner.1} parent=15 // pred_check
          %p285 = pneg %p188
        $region38: #{mamba_scanner.1} parent=15 // pred_check_branch
          %287 = sbr.rel (%p285) target = $region40
        $region39: #{mamba_scanner.1} parent=15 // pred_region
          %p288 = scmp.lt.s32.totalorder %s22, 3
          %s289 = scalar_select %p288, %s22, 3
          %s290 = scalar_lea.vmem %s5, %s289
        $region40: #{mamba_scanner.1} parent=15 // pred_fallthru
          _
      $region16: #{mamba_scanner.1} parent=5 // pred_fallthru
        _
      %p291 = scmp.le.s32.totalorder 1, %s15
      %p292 = scmp.lt.s32.totalorder %s15, 17
      %p293 = pnand %p291, %p292
      %p294 = pneg %p293
      // Predicated region
      $region41: #{mamba_scanner.1} parent=5 // pred_check
        _
      $region42: #{mamba_scanner.1} parent=5 // pred_check_branch
        %296 = sbr.rel (%p293) target = $region44
      $region43: #{mamba_scanner.1} parent=5 // pred_region
        %s297 = ssub.s32 %s15, 1
        %p298 = scmp.lt.s32.totalorder %s26, 1
        %s299 = scalar_select %p298, %s26, 1
        %p300 = scmp.lt.s32.totalorder %s25, 3
        %s301 = scalar_select %p300, %s25, 3
        %p302 = scmp.lt.s32.totalorder %s27, 1
        %s303 = scalar_select %p302, %s27, 1
        %s304 = smul.addr %s301, 2
        %s305 = sadd.s32 %s303, %s304
        %s306 = smul.addr %s299, 8
        %s307 = sadd.s32 %s305, %s306
        %s308 = smul.addr %s307, 8
        %s309 = scalar_lea.vmem %s0, %s308
        %p310 = pneg %p64
        %p311 = pneg %p61
        %p312 = scmp.lt.s32.totalorder %s25, 3
        %s313 = scalar_select %p312, %s25, 3
        %s314 = smul.addr %s313, 8
        %s315 = scalar_lea.vmem %s1, %s314
        %p316 = pneg %p90
        %p317 = pneg %p87
        %p318 = scmp.lt.s32.totalorder %s25, 3
        %s319 = scalar_select %p318, %s25, 3
        %s320 = smul.addr %s319, 8
        %s321 = scalar_lea.vmem %s2, %s320
        %p322 = pneg %p116
        %p323 = pneg %p113
        %p324 = scmp.lt.s32.totalorder %s25, 3
        %s325 = scalar_select %p324, %s25, 3
        %s326 = smul.addr %s325, 8
        %s327 = scalar_lea.vmem %s3, %s326
        %p328 = pneg %p142
        %p329 = pneg %p139
        %p330 = scmp.lt.s32.totalorder %s25, 3
        %s331 = scalar_select %p330, %s25, 3
        %s332 = scalar_lea.vmem %s4, %s331
        %p333 = pneg %p168
        %p334 = pneg %p165
        %p335 = scmp.lt.s32.totalorder %s25, 3
        %s336 = scalar_select %p335, %s25, 3
        %s337 = scalar_lea.vmem %s5, %s336
        %p338 = pneg %p194
        %p339 = pneg %p191
        %p340 = pneg %p224
        %p341 = pneg %p221
        %s342 = sand.u32 %s211, 1
        %s343 = scalar_lea.sflag [#allocation11], %s342
        %s344 = sand.u32 %s211, 1
        %s345 = smul.addr %s344, 8
        %s346 = scalar_lea.vmem [#allocation10], %s345
        %p347 = scmp.lt.s32.totalorder %s26, 1
        %s348 = scalar_select %p347, %s26, 1
        %p349 = scmp.lt.s32.totalorder %s25, 3
        %s350 = scalar_select %p349, %s25, 3
        %p351 = scmp.lt.s32.totalorder %s27, 1
        %s352 = scalar_select %p351, %s27, 1
        %s353 = smul.addr %s350, 2
        %s354 = sadd.s32 %s352, %s353
        %s355 = smul.addr %s348, 8
        %s356 = sadd.s32 %s354, %s355
        %s357 = smul.addr %s356, 8
        %s358 = scalar_lea.vmem %s0, %s357
        %p359 = scmp.lt.s32.totalorder %s25, 3
        %s360 = scalar_select %p359, %s25, 3
        %s361 = smul.addr %s360, 8
        %s362 = scalar_lea.vmem %s1, %s361
        %p363 = scmp.lt.s32.totalorder %s25, 3
        %s364 = scalar_select %p363, %s25, 3
        %s365 = smul.addr %s364, 8
        %s366 = scalar_lea.vmem %s2, %s365
        %p367 = scmp.lt.s32.totalorder %s25, 3
        %s368 = scalar_select %p367, %s25, 3
        %s369 = smul.addr %s368, 8
        %s370 = scalar_lea.vmem %s3, %s369
        %p371 = scmp.lt.s32.totalorder %s25, 3
        %s372 = scalar_select %p371, %s25, 3
        %s373 = scalar_lea.vmem %s4, %s372
        %p374 = scmp.lt.s32.totalorder %s25, 3
        %s375 = scalar_select %p374, %s25, 3
        %s376 = scalar_lea.vmem %s5, %s375
        %p377 = scmp.eq.s32.totalorder %s27, 0
        // Predicated region
        $region45: #{mamba_scanner.1} parent=43 // pred_check
          %p378 = pneg %p377
        $region46: #{mamba_scanner.1} parent=43 // pred_check_branch
          %380 = sbr.rel (%p378) target = $region48
        $region47: #{mamba_scanner.1} parent=43 // pred_region
          %vm381 = vcmask 64512
          %382 = vst.msk [vmem:[#allocation2] sm:$0xff] %vm381, 0.0
        $region48: #{mamba_scanner.1} parent=43 // pred_fallthru
          _
        %v383 = vld [vmem:[%s358] sm:$0xff]
        %384 = vxpose.xlu0.b32.start [1/16] %v383, 128
        %385 = vxpose.xlu0.b32.cont [2/16] 0.0, 128
        %386 = vxpose.xlu0.b32.cont [3/16] 0.0, 128
        %387 = vxpose.xlu0.b32.cont [4/16] 0.0, 128
        %388 = vxpose.xlu0.b32.cont [5/16] 0.0, 128
        %389 = vxpose.xlu0.b32.cont [6/16] 0.0, 128
        %390 = vxpose.xlu0.b32.cont [7/16] 0.0, 128
        %391 = vxpose.xlu0.b32.cont [8/16] 0.0, 128
        %392 = vxpose.xlu0.b32.cont [9/16] 0.0, 128
        %393 = vxpose.xlu0.b32.cont [10/16] 0.0, 128
        %394 = vxpose.xlu0.b32.cont [11/16] 0.0, 128
        %395 = vxpose.xlu0.b32.cont [12/16] 0.0, 128
        %396 = vxpose.xlu0.b32.cont [13/16] 0.0, 128
        %397 = vxpose.xlu0.b32.cont [14/16] 0.0, 128
        %398 = vxpose.xlu0.b32.cont [15/16] 0.0, 128
        %399 = vxpose.xlu0.b32.end [16/16] 0.0, 128
        %v400 = vpop.trf.xlu0
        %v401 = vpop.trf.xlu0
        %v402 = vpop.trf.xlu0
        %v403 = vpop.trf.xlu0
        %v404 = vpop.trf.xlu0
        %v405 = vpop.trf.xlu0
        %v406 = vpop.trf.xlu0
        %v407 = vpop.trf.xlu0
        %v408 = vpop.trf.xlu0
        %v409 = vpop.trf.xlu0
        %v410 = vpop.trf.xlu0
        %v411 = vpop.trf.xlu0
        %v412 = vpop.trf.xlu0
        %v413 = vpop.trf.xlu0
        %v414 = vpop.trf.xlu0
        %v415 = vpop.trf.xlu0
        %vm416 = vcmask 64512
        %417 = vst.msk [vmem:[#allocation3] sm:$0xff] %vm416, %v400
        %418 = vst.msk [vmem:[#allocation3 + $0x8] sm:$0xff] %vm416, %v401
        %419 = vst.msk [vmem:[#allocation3 + $0x10] sm:$0xff] %vm416, %v402
        %420 = vst.msk [vmem:[#allocation3 + $0x18] sm:$0xff] %vm416, %v403
        %421 = vst.msk [vmem:[#allocation3 + $0x20] sm:$0xff] %vm416, %v404
        %422 = vst.msk [vmem:[#allocation3 + $0x28] sm:$0xff] %vm416, %v405
        %423 = vst.msk [vmem:[#allocation3 + $0x30] sm:$0xff] %vm416, %v406
        %424 = vst.msk [vmem:[#allocation3 + $0x38] sm:$0xff] %vm416, %v407
        %425 = vst.msk [vmem:[#allocation3 + $0x40] sm:$0xff] %vm416, %v408
        %426 = vst.msk [vmem:[#allocation3 + $0x48] sm:$0xff] %vm416, %v409
        %427 = vst.msk [vmem:[#allocation3 + $0x50] sm:$0xff] %vm416, %v410
        %428 = vst.msk [vmem:[#allocation3 + $0x58] sm:$0xff] %vm416, %v411
        %429 = vst.msk [vmem:[#allocation3 + $0x60] sm:$0xff] %vm416, %v412
        %430 = vst.msk [vmem:[#allocation3 + $0x68] sm:$0xff] %vm416, %v413
        %431 = vst.msk [vmem:[#allocation3 + $0x70] sm:$0xff] %vm416, %v414
        %432 = vst.msk [vmem:[#allocation3 + $0x78] sm:$0xff] %vm416, %v415
        %v433 = vld [vmem:[%s362] sm:$0xff]
        %v434 = vld [vmem:[%s376] sm:$0x1]
        %v436 = vlaneseq
        %v437 = vshrl.u32 %v436, 7
        %v438 = vsub.s32 0, %v437
        %v439 = vrot.slane %v434, %v438
        %v442 = vsel %vm416, %v400, 0
        %v445 = vsel %vm416, %v401, 0
        %v448 = vsel %vm416, %v402, 0
        %v451 = vsel %vm416, %v403, 0
        %v454 = vsel %vm416, %v404, 0
        %v457 = vsel %vm416, %v405, 0
        %v460 = vsel %vm416, %v406, 0
        %v463 = vsel %vm416, %v407, 0
        %v466 = vsel %vm416, %v408, 0
        %v469 = vsel %vm416, %v409, 0
        %v472 = vsel %vm416, %v410, 0
        %v475 = vsel %vm416, %v411, 0
        %v478 = vsel %vm416, %v412, 0
        %v481 = vsel %vm416, %v413, 0
        %v484 = vsel %vm416, %v414, 0
        %v487 = vsel %vm416, %v415, 0
        %489 = vmatprep.subr.mxu0 0.0
        %490 = vmatpush1.msra.mxu0 0.0
        %491 = vmatprep.subr.mxu0 0.0
        %492 = vmatpush1.msra.mxu0 0.0
        %493 = vmatprep.subr.mxu0 0.0
        %494 = vmatpush1.msra.mxu0 0.0
        %495 = vmatprep.subr.mxu0 0.0
        %496 = vmatpush1.msra.mxu0 0.0
        %497 = vmatprep.subr.mxu0 0.0
        %498 = vmatpush1.msra.mxu0 0.0
        %499 = vmatprep.subr.mxu0 0.0
        %500 = vmatpush1.msra.mxu0 0.0
        %501 = vmatprep.subr.mxu0 0.0
        %502 = vmatpush1.msra.mxu0 0.0
        %503 = vmatprep.subr.mxu0 0.0
        %504 = vmatpush1.msra.mxu0 0.0
        %505 = vmatprep.subr.mxu0 0.0
        %506 = vmatpush1.msra.mxu0 0.0
        %507 = vmatprep.subr.mxu0 0.0
        %508 = vmatpush1.msra.mxu0 0.0
        %509 = vmatprep.subr.mxu0 0.0
        %510 = vmatpush1.msra.mxu0 0.0
        %511 = vmatprep.subr.mxu0 0.0
        %512 = vmatpush1.msra.mxu0 0.0
        %513 = vmatprep.subr.mxu0 0.0
        %514 = vmatpush1.msra.mxu0 0.0
        %515 = vmatprep.subr.mxu0 0.0
        %516 = vmatpush1.msra.mxu0 0.0
        %517 = vmatprep.subr.mxu0 0.0
        %518 = vmatpush1.msra.mxu0 0.0
        %519 = vmatprep.subr.mxu0 0.0
        %520 = vmatpush1.msra.mxu0 %v433
        %521 = vmatprep.subr.mxu0 0.0
        %522 = vmatpush2.msra.mxu0 0.0
        %523 = vmatprep.subr.mxu0 0.0
        %524 = vmatpush2.msra.mxu0 0.0
        %525 = vmatprep.subr.mxu0 0.0
        %526 = vmatpush2.msra.mxu0 0.0
        %527 = vmatprep.subr.mxu0 0.0
        %528 = vmatpush2.msra.mxu0 0.0
        %529 = vmatprep.subr.mxu0 0.0
        %530 = vmatpush2.msra.mxu0 0.0
        %531 = vmatprep.subr.mxu0 0.0
        %532 = vmatpush2.msra.mxu0 0.0
        %533 = vmatprep.subr.mxu0 0.0
        %534 = vmatpush2.msra.mxu0 0.0
        %535 = vmatprep.subr.mxu0 0.0
        %536 = vmatpush2.msra.mxu0 0.0
        %537 = vmatprep.subr.mxu0 0.0
        %538 = vmatpush2.msra.mxu0 0.0
        %539 = vmatprep.subr.mxu0 0.0
        %540 = vmatpush2.msra.mxu0 0.0
        %541 = vmatprep.subr.mxu0 0.0
        %542 = vmatpush2.msra.mxu0 0.0
        %543 = vmatprep.subr.mxu0 0.0
        %544 = vmatpush2.msra.mxu0 0.0
        %545 = vmatprep.subr.mxu0 0.0
        %546 = vmatpush2.msra.mxu0 0.0
        %547 = vmatprep.subr.mxu0 0.0
        %548 = vmatpush2.msra.mxu0 0.0
        %549 = vmatprep.subr.mxu0 0.0
        %550 = vmatpush2.msra.mxu0 0.0
        %551 = vmatprep.subr.mxu0 0.0
        %552 = vmatpush2.msra.mxu0 0.0
        %553 = vmatprep.mubr.f32.mxu0 0.0
        %554 = vmatmul.mubr.f32.gmra.mxu0 %v442
        %v555 = vpop.f32.mrf.mxu0
        %v556 = vadd.f32 %v439, %v555
        %v557 = vpop.f32.mrf.mxu0
        %558 = vmatprep.mubr.f32.mxu0 0.0
        %559 = vmatmul.mubr.f32.gmra.mxu0 %v445
        %v560 = vpop.f32.mrf.mxu0
        %v561 = vadd.f32 %v439, %v560
        %v562 = vpop.f32.mrf.mxu0
        %563 = vmatprep.mubr.f32.mxu0 0.0
        %564 = vmatmul.mubr.f32.gmra.mxu0 %v448
        %v565 = vpop.f32.mrf.mxu0
        %v566 = vadd.f32 %v439, %v565
        %v567 = vpop.f32.mrf.mxu0
        %568 = vmatprep.mubr.f32.mxu0 0.0
        %569 = vmatmul.mubr.f32.gmra.mxu0 %v451
        %v570 = vpop.f32.mrf.mxu0
        %v571 = vadd.f32 %v439, %v570
        %v572 = vpop.f32.mrf.mxu0
        %573 = vmatprep.mubr.f32.mxu0 0.0
        %574 = vmatmul.mubr.f32.gmra.mxu0 %v454
        %v575 = vpop.f32.mrf.mxu0
        %v576 = vadd.f32 %v439, %v575
        %v577 = vpop.f32.mrf.mxu0
        %578 = vmatprep.mubr.f32.mxu0 0.0
        %579 = vmatmul.mubr.f32.gmra.mxu0 %v457
        %v580 = vpop.f32.mrf.mxu0
        %v581 = vadd.f32 %v439, %v580
        %v582 = vpop.f32.mrf.mxu0
        %583 = vmatprep.mubr.f32.mxu0 0.0
        %584 = vmatmul.mubr.f32.gmra.mxu0 %v460
        %v585 = vpop.f32.mrf.mxu0
        %v586 = vadd.f32 %v439, %v585
        %v587 = vpop.f32.mrf.mxu0
        %588 = vmatprep.mubr.f32.mxu0 0.0
        %589 = vmatmul.mubr.f32.gmra.mxu0 %v463
        %v590 = vpop.f32.mrf.mxu0
        %v591 = vadd.f32 %v439, %v590
        %v592 = vpop.f32.mrf.mxu0
        %593 = vmatprep.mubr.f32.mxu0 0.0
        %594 = vmatmul.mubr.f32.gmra.mxu0 %v466
        %v595 = vpop.f32.mrf.mxu0
        %v596 = vadd.f32 %v439, %v595
        %v597 = vpop.f32.mrf.mxu0
        %598 = vmatprep.mubr.f32.mxu0 0.0
        %599 = vmatmul.mubr.f32.gmra.mxu0 %v469
        %v600 = vpop.f32.mrf.mxu0
        %v601 = vadd.f32 %v439, %v600
        %v602 = vpop.f32.mrf.mxu0
        %603 = vmatprep.mubr.f32.mxu0 0.0
        %604 = vmatmul.mubr.f32.gmra.mxu0 %v472
        %v605 = vpop.f32.mrf.mxu0
        %v606 = vadd.f32 %v439, %v605
        %v607 = vpop.f32.mrf.mxu0
        %608 = vmatprep.mubr.f32.mxu0 0.0
        %609 = vmatmul.mubr.f32.gmra.mxu0 %v475
        %v610 = vpop.f32.mrf.mxu0
        %v611 = vadd.f32 %v439, %v610
        %v612 = vpop.f32.mrf.mxu0
        %613 = vmatprep.mubr.f32.mxu0 0.0
        %614 = vmatmul.mubr.f32.gmra.mxu0 %v478
        %v615 = vpop.f32.mrf.mxu0
        %v616 = vadd.f32 %v439, %v615
        %v617 = vpop.f32.mrf.mxu0
        %618 = vmatprep.mubr.f32.mxu0 0.0
        %619 = vmatmul.mubr.f32.gmra.mxu0 %v481
        %v620 = vpop.f32.mrf.mxu0
        %v621 = vadd.f32 %v439, %v620
        %v622 = vpop.f32.mrf.mxu0
        %623 = vmatprep.mubr.f32.mxu0 0.0
        %624 = vmatmul.mubr.f32.gmra.mxu0 %v484
        %v625 = vpop.f32.mrf.mxu0
        %v626 = vadd.f32 %v439, %v625
        %v627 = vpop.f32.mrf.mxu0
        %628 = vmatprep.mubr.f32.mxu0 0.0
        %629 = vmatmul.mubr.f32.gmra.mxu0 %v487
        %v630 = vpop.f32.mrf.mxu0
        %v631 = vadd.f32 %v439, %v630
        %v632 = vpop.f32.mrf.mxu0
        %633 = vdwg.mxu0
        %v634 = vmax.f32 %v556, 0.0
        %v635 = vmax.f32 %v561, 0.0
        %v636 = vmax.f32 %v566, 0.0
        %v637 = vmax.f32 %v571, 0.0
        %v638 = vmax.f32 %v576, 0.0
        %v639 = vmax.f32 %v581, 0.0
        %v640 = vmax.f32 %v586, 0.0
        %v641 = vmax.f32 %v591, 0.0
        %v642 = vmax.f32 %v596, 0.0
        %v643 = vmax.f32 %v601, 0.0
        %v644 = vmax.f32 %v606, 0.0
        %v645 = vmax.f32 %v611, 0.0
        %v646 = vmax.f32 %v616, 0.0
        %v647 = vmax.f32 %v621, 0.0
        %v648 = vmax.f32 %v626, 0.0
        %v649 = vmax.f32 %v631, 0.0
        %vm650 = vcmp.ne.f32.partialorder %v556, %v556
        %vm651 = vcmp.ne.f32.partialorder %v561, %v561
        %vm652 = vcmp.ne.f32.partialorder %v566, %v566
        %vm653 = vcmp.ne.f32.partialorder %v571, %v571
        %vm654 = vcmp.ne.f32.partialorder %v576, %v576
        %vm655 = vcmp.ne.f32.partialorder %v581, %v581
        %vm656 = vcmp.ne.f32.partialorder %v586, %v586
        %vm657 = vcmp.ne.f32.partialorder %v591, %v591
        %vm658 = vcmp.ne.f32.partialorder %v596, %v596
        %vm659 = vcmp.ne.f32.partialorder %v601, %v601
        %vm660 = vcmp.ne.f32.partialorder %v606, %v606
        %vm661 = vcmp.ne.f32.partialorder %v611, %v611
        %vm662 = vcmp.ne.f32.partialorder %v616, %v616
        %vm663 = vcmp.ne.f32.partialorder %v621, %v621
        %vm664 = vcmp.ne.f32.partialorder %v626, %v626
        %vm665 = vcmp.ne.f32.partialorder %v631, %v631
        %v666 = vadd.f32 %v556, 0.0
        %v667 = vadd.f32 %v561, 0.0
        %v668 = vadd.f32 %v566, 0.0
        %v669 = vadd.f32 %v571, 0.0
        %v670 = vadd.f32 %v576, 0.0
        %v671 = vadd.f32 %v581, 0.0
        %v672 = vadd.f32 %v586, 0.0
        %v673 = vadd.f32 %v591, 0.0
        %v674 = vadd.f32 %v596, 0.0
        %v675 = vadd.f32 %v601, 0.0
        %v676 = vadd.f32 %v606, 0.0
        %v677 = vadd.f32 %v611, 0.0
        %v678 = vadd.f32 %v616, 0.0
        %v679 = vadd.f32 %v621, 0.0
        %v680 = vadd.f32 %v626, 0.0
        %v681 = vadd.f32 %v631, 0.0
        %v682 = vand.u32 2147483647, %v556
        %v683 = vand.u32 2147483647, %v561
        %v684 = vand.u32 2147483647, %v566
        %v685 = vand.u32 2147483647, %v571
        %v686 = vand.u32 2147483647, %v576
        %v687 = vand.u32 2147483647, %v581
        %v688 = vand.u32 2147483647, %v586
        %v689 = vand.u32 2147483647, %v591
        %v690 = vand.u32 2147483647, %v596
        %v691 = vand.u32 2147483647, %v601
        %v692 = vand.u32 2147483647, %v606
        %v693 = vand.u32 2147483647, %v611
        %v694 = vand.u32 2147483647, %v616
        %v695 = vand.u32 2147483647, %v621
        %v696 = vand.u32 2147483647, %v626
        %v697 = vand.u32 2147483647, %v631
        %v698 = vsub.f32 0.0, %v682
        %v699 = vsub.f32 0.0, %v683
        %v700 = vsub.f32 0.0, %v684
        %v701 = vsub.f32 0.0, %v685
        %v702 = vsub.f32 0.0, %v686
        %v703 = vsub.f32 0.0, %v687
        %v704 = vsub.f32 0.0, %v688
        %v705 = vsub.f32 0.0, %v689
        %v706 = vsub.f32 0.0, %v690
        %v707 = vsub.f32 0.0, %v691
        %v708 = vsub.f32 0.0, %v692
        %v709 = vsub.f32 0.0, %v693
        %v710 = vsub.f32 0.0, %v694
        %v711 = vsub.f32 0.0, %v695
        %v712 = vsub.f32 0.0, %v696
        %v713 = vsub.f32 0.0, %v697
        %v714 = vmul.f32 %v698, 1.442695
        %v715 = vpow.pop %v714
        %v716 = vmul.f32 %v699, 1.442695
        %v717 = vpow.pop %v716
        %v718 = vmul.f32 %v700, 1.442695
        %v719 = vpow.pop %v718
        %v720 = vmul.f32 %v701, 1.442695
        %v721 = vpow.pop %v720
        %v722 = vmul.f32 %v702, 1.442695
        %v723 = vpow.pop %v722
        %v724 = vmul.f32 %v703, 1.442695
        %v725 = vpow.pop %v724
        %v726 = vmul.f32 %v704, 1.442695
        %v727 = vpow.pop %v726
        %v728 = vmul.f32 %v705, 1.442695
        %v729 = vpow.pop %v728
        %v730 = vmul.f32 %v706, 1.442695
        %v731 = vpow.pop %v730
        %v732 = vmul.f32 %v707, 1.442695
        %v733 = vpow.pop %v732
        %v734 = vmul.f32 %v708, 1.442695
        %v735 = vpow.pop %v734
        %v736 = vmul.f32 %v709, 1.442695
        %v737 = vpow.pop %v736
        %v738 = vmul.f32 %v710, 1.442695
        %v739 = vpow.pop %v738
        %v740 = vmul.f32 %v711, 1.442695
        %v741 = vpow.pop %v740
        %v742 = vmul.f32 %v712, 1.442695
        %v743 = vpow.pop %v742
        %v744 = vmul.f32 %v713, 1.442695
        %v745 = vpow.pop %v744
        %v746 = vadd.f32 %v715, 1.0
        %v747 = vlog2.pop %v746
        %v748 = vmul.f32 %v747, 0.6931472
        %v749 = vmul.f32 -0.5, %v715
        %v750 = vadd.f32 %v749, 1.0
        %v751 = vmul.f32 %v750, %v715
        %v752 = vand.u32 2147483647, %v715
        %vm753 = vcmp.lt.f32.partialorder %v752, 0.0004427343
        %v754 = vsel %vm753, %v751, %v748
        %v755 = vadd.f32 %v717, 1.0
        %v756 = vlog2.pop %v755
        %v757 = vmul.f32 %v756, 0.6931472
        %v758 = vmul.f32 -0.5, %v717
        %v759 = vadd.f32 %v758, 1.0
        %v760 = vmul.f32 %v759, %v717
        %v761 = vand.u32 2147483647, %v717
        %vm762 = vcmp.lt.f32.partialorder %v761, 0.0004427343
        %v763 = vsel %vm762, %v760, %v757
        %v764 = vadd.f32 %v719, 1.0
        %v765 = vlog2.pop %v764
        %v766 = vmul.f32 %v765, 0.6931472
        %v767 = vmul.f32 -0.5, %v719
        %v768 = vadd.f32 %v767, 1.0
        %v769 = vmul.f32 %v768, %v719
        %v770 = vand.u32 2147483647, %v719
        %vm771 = vcmp.lt.f32.partialorder %v770, 0.0004427343
        %v772 = vsel %vm771, %v769, %v766
        %v773 = vadd.f32 %v721, 1.0
        %v774 = vlog2.pop %v773
        %v775 = vmul.f32 %v774, 0.6931472
        %v776 = vmul.f32 -0.5, %v721
        %v777 = vadd.f32 %v776, 1.0
        %v778 = vmul.f32 %v777, %v721
        %v779 = vand.u32 2147483647, %v721
        %vm780 = vcmp.lt.f32.partialorder %v779, 0.0004427343
        %v781 = vsel %vm780, %v778, %v775
        %v782 = vadd.f32 %v723, 1.0
        %v783 = vlog2.pop %v782
        %v784 = vmul.f32 %v783, 0.6931472
        %v785 = vmul.f32 -0.5, %v723
        %v786 = vadd.f32 %v785, 1.0
        %v787 = vmul.f32 %v786, %v723
        %v788 = vand.u32 2147483647, %v723
        %vm789 = vcmp.lt.f32.partialorder %v788, 0.0004427343
        %v790 = vsel %vm789, %v787, %v784
        %v791 = vadd.f32 %v725, 1.0
        %v792 = vlog2.pop %v791
        %v793 = vmul.f32 %v792, 0.6931472
        %v794 = vmul.f32 -0.5, %v725
        %v795 = vadd.f32 %v794, 1.0
        %v796 = vmul.f32 %v795, %v725
        %v797 = vand.u32 2147483647, %v725
        %vm798 = vcmp.lt.f32.partialorder %v797, 0.0004427343
        %v799 = vsel %vm798, %v796, %v793
        %v800 = vadd.f32 %v727, 1.0
        %v801 = vlog2.pop %v800
        %v802 = vmul.f32 %v801, 0.6931472
        %v803 = vmul.f32 -0.5, %v727
        %v804 = vadd.f32 %v803, 1.0
        %v805 = vmul.f32 %v804, %v727
        %v806 = vand.u32 2147483647, %v727
        %vm807 = vcmp.lt.f32.partialorder %v806, 0.0004427343
        %v808 = vsel %vm807, %v805, %v802
        %v809 = vadd.f32 %v729, 1.0
        %v810 = vlog2.pop %v809
        %v811 = vmul.f32 %v810, 0.6931472
        %v812 = vmul.f32 -0.5, %v729
        %v813 = vadd.f32 %v812, 1.0
        %v814 = vmul.f32 %v813, %v729
        %v815 = vand.u32 2147483647, %v729
        %vm816 = vcmp.lt.f32.partialorder %v815, 0.0004427343
        %v817 = vsel %vm816, %v814, %v811
        %v818 = vadd.f32 %v731, 1.0
        %v819 = vlog2.pop %v818
        %v820 = vmul.f32 %v819, 0.6931472
        %v821 = vmul.f32 -0.5, %v731
        %v822 = vadd.f32 %v821, 1.0
        %v823 = vmul.f32 %v822, %v731
        %v824 = vand.u32 2147483647, %v731
        %vm825 = vcmp.lt.f32.partialorder %v824, 0.0004427343
        %v826 = vsel %vm825, %v823, %v820
        %v827 = vadd.f32 %v733, 1.0
        %v828 = vlog2.pop %v827
        %v829 = vmul.f32 %v828, 0.6931472
        %v830 = vmul.f32 -0.5, %v733
        %v831 = vadd.f32 %v830, 1.0
        %v832 = vmul.f32 %v831, %v733
        %v833 = vand.u32 2147483647, %v733
        %vm834 = vcmp.lt.f32.partialorder %v833, 0.0004427343
        %v835 = vsel %vm834, %v832, %v829
        %v836 = vadd.f32 %v735, 1.0
        %v837 = vlog2.pop %v836
        %v838 = vmul.f32 %v837, 0.6931472
        %v839 = vmul.f32 -0.5, %v735
        %v840 = vadd.f32 %v839, 1.0
        %v841 = vmul.f32 %v840, %v735
        %v842 = vand.u32 2147483647, %v735
        %vm843 = vcmp.lt.f32.partialorder %v842, 0.0004427343
        %v844 = vsel %vm843, %v841, %v838
        %v845 = vadd.f32 %v737, 1.0
        %v846 = vlog2.pop %v845
        %v847 = vmul.f32 %v846, 0.6931472
        %v848 = vmul.f32 -0.5, %v737
        %v849 = vadd.f32 %v848, 1.0
        %v850 = vmul.f32 %v849, %v737
        %v851 = vand.u32 2147483647, %v737
        %vm852 = vcmp.lt.f32.partialorder %v851, 0.0004427343
        %v853 = vsel %vm852, %v850, %v847
        %v854 = vadd.f32 %v739, 1.0
        %v855 = vlog2.pop %v854
        %v856 = vmul.f32 %v855, 0.6931472
        %v857 = vmul.f32 -0.5, %v739
        %v858 = vadd.f32 %v857, 1.0
        %v859 = vmul.f32 %v858, %v739
        %v860 = vand.u32 2147483647, %v739
        %vm861 = vcmp.lt.f32.partialorder %v860, 0.0004427343
        %v862 = vsel %vm861, %v859, %v856
        %v863 = vadd.f32 %v741, 1.0
        %v864 = vlog2.pop %v863
        %v865 = vmul.f32 %v864, 0.6931472
        %v866 = vmul.f32 -0.5, %v741
        %v867 = vadd.f32 %v866, 1.0
        %v868 = vmul.f32 %v867, %v741
        %v869 = vand.u32 2147483647, %v741
        %vm870 = vcmp.lt.f32.partialorder %v869, 0.0004427343
        %v871 = vsel %vm870, %v868, %v865
        %v872 = vadd.f32 %v743, 1.0
        %v873 = vlog2.pop %v872
        %v874 = vmul.f32 %v873, 0.6931472
        %v875 = vmul.f32 -0.5, %v743
        %v876 = vadd.f32 %v875, 1.0
        %v877 = vmul.f32 %v876, %v743
        %v878 = vand.u32 2147483647, %v743
        %vm879 = vcmp.lt.f32.partialorder %v878, 0.0004427343
        %v880 = vsel %vm879, %v877, %v874
        %v881 = vadd.f32 %v745, 1.0
        %v882 = vlog2.pop %v881
        %v883 = vmul.f32 %v882, 0.6931472
        %v884 = vmul.f32 -0.5, %v745
        %v885 = vadd.f32 %v884, 1.0
        %v886 = vmul.f32 %v885, %v745
        %v887 = vand.u32 2147483647, %v745
        %vm888 = vcmp.lt.f32.partialorder %v887, 0.0004427343
        %v889 = vsel %vm888, %v886, %v883
        %v890 = vadd.f32 %v634, %v754
        %v891 = vadd.f32 %v635, %v763
        %v892 = vadd.f32 %v636, %v772
        %v893 = vadd.f32 %v637, %v781
        %v894 = vadd.f32 %v638, %v790
        %v895 = vadd.f32 %v639, %v799
        %v896 = vadd.f32 %v640, %v808
        %v897 = vadd.f32 %v641, %v817
        %v898 = vadd.f32 %v642, %v826
        %v899 = vadd.f32 %v643, %v835
        %v900 = vadd.f32 %v644, %v844
        %v901 = vadd.f32 %v645, %v853
        %v902 = vadd.f32 %v646, %v862
        %v903 = vadd.f32 %v647, %v871
        %v904 = vadd.f32 %v648, %v880
        %v905 = vadd.f32 %v649, %v889
        %v906 = vsel %vm650, %v666, %v890
        %v907 = vsel %vm651, %v667, %v891
        %v908 = vsel %vm652, %v668, %v892
        %v909 = vsel %vm653, %v669, %v893
        %v910 = vsel %vm654, %v670, %v894
        %v911 = vsel %vm655, %v671, %v895
        %v912 = vsel %vm656, %v672, %v896
        %v913 = vsel %vm657, %v673, %v897
        %v914 = vsel %vm658, %v674, %v898
        %v915 = vsel %vm659, %v675, %v899
        %v916 = vsel %vm660, %v676, %v900
        %v917 = vsel %vm661, %v677, %v901
        %v918 = vsel %vm662, %v678, %v902
        %v919 = vsel %vm663, %v679, %v903
        %v920 = vsel %vm664, %v680, %v904
        %v921 = vsel %vm665, %v681, %v905
        %922 = vst.msk [vmem:[#allocation4] sm:$0xff] %vm416, %v906
        %923 = vst.msk [vmem:[#allocation4 + $0x8] sm:$0xff] %vm416, %v907
        %924 = vst.msk [vmem:[#allocation4 + $0x10] sm:$0xff] %vm416, %v908
        %925 = vst.msk [vmem:[#allocation4 + $0x18] sm:$0xff] %vm416, %v909
        %926 = vst.msk [vmem:[#allocation4 + $0x20] sm:$0xff] %vm416, %v910
        %927 = vst.msk [vmem:[#allocation4 + $0x28] sm:$0xff] %vm416, %v911
        %928 = vst.msk [vmem:[#allocation4 + $0x30] sm:$0xff] %vm416, %v912
        %929 = vst.msk [vmem:[#allocation4 + $0x38] sm:$0xff] %vm416, %v913
        %930 = vst.msk [vmem:[#allocation4 + $0x40] sm:$0xff] %vm416, %v914
        %931 = vst.msk [vmem:[#allocation4 + $0x48] sm:$0xff] %vm416, %v915
        %932 = vst.msk [vmem:[#allocation4 + $0x50] sm:$0xff] %vm416, %v916
        %933 = vst.msk [vmem:[#allocation4 + $0x58] sm:$0xff] %vm416, %v917
        %934 = vst.msk [vmem:[#allocation4 + $0x60] sm:$0xff] %vm416, %v918
        %935 = vst.msk [vmem:[#allocation4 + $0x68] sm:$0xff] %vm416, %v919
        %936 = vst.msk [vmem:[#allocation4 + $0x70] sm:$0xff] %vm416, %v920
        %937 = vst.msk [vmem:[#allocation4 + $0x78] sm:$0xff] %vm416, %v921
        %v938 = vld [vmem:[%s366] sm:$0xff]
        %939 = vmatprep.subr.mxu0 0.0
        %940 = vmatpush1.msra.mxu0 0.0
        %941 = vmatprep.subr.mxu0 0.0
        %942 = vmatpush1.msra.mxu0 0.0
        %943 = vmatprep.subr.mxu0 0.0
        %944 = vmatpush1.msra.mxu0 0.0
        %945 = vmatprep.subr.mxu0 0.0
        %946 = vmatpush1.msra.mxu0 0.0
        %947 = vmatprep.subr.mxu0 0.0
        %948 = vmatpush1.msra.mxu0 0.0
        %949 = vmatprep.subr.mxu0 0.0
        %950 = vmatpush1.msra.mxu0 0.0
        %951 = vmatprep.subr.mxu0 0.0
        %952 = vmatpush1.msra.mxu0 0.0
        %953 = vmatprep.subr.mxu0 0.0
        %954 = vmatpush1.msra.mxu0 0.0
        %955 = vmatprep.subr.mxu0 0.0
        %956 = vmatpush1.msra.mxu0 0.0
        %957 = vmatprep.subr.mxu0 0.0
        %958 = vmatpush1.msra.mxu0 0.0
        %959 = vmatprep.subr.mxu0 0.0
        %960 = vmatpush1.msra.mxu0 0.0
        %961 = vmatprep.subr.mxu0 0.0
        %962 = vmatpush1.msra.mxu0 0.0
        %963 = vmatprep.subr.mxu0 0.0
        %964 = vmatpush1.msra.mxu0 0.0
        %965 = vmatprep.subr.mxu0 0.0
        %966 = vmatpush1.msra.mxu0 0.0
        %967 = vmatprep.subr.mxu0 0.0
        %968 = vmatpush1.msra.mxu0 0.0
        %969 = vmatprep.subr.mxu0 0.0
        %970 = vmatpush1.msra.mxu0 %v938
        %971 = vmatprep.subr.mxu0 0.0
        %972 = vmatpush2.msra.mxu0 0.0
        %973 = vmatprep.subr.mxu0 0.0
        %974 = vmatpush2.msra.mxu0 0.0
        %975 = vmatprep.subr.mxu0 0.0
        %976 = vmatpush2.msra.mxu0 0.0
        %977 = vmatprep.subr.mxu0 0.0
        %978 = vmatpush2.msra.mxu0 0.0
        %979 = vmatprep.subr.mxu0 0.0
        %980 = vmatpush2.msra.mxu0 0.0
        %981 = vmatprep.subr.mxu0 0.0
        %982 = vmatpush2.msra.mxu0 0.0
        %983 = vmatprep.subr.mxu0 0.0
        %984 = vmatpush2.msra.mxu0 0.0
        %985 = vmatprep.subr.mxu0 0.0
        %986 = vmatpush2.msra.mxu0 0.0
        %987 = vmatprep.subr.mxu0 0.0
        %988 = vmatpush2.msra.mxu0 0.0
        %989 = vmatprep.subr.mxu0 0.0
        %990 = vmatpush2.msra.mxu0 0.0
        %991 = vmatprep.subr.mxu0 0.0
        %992 = vmatpush2.msra.mxu0 0.0
        %993 = vmatprep.subr.mxu0 0.0
        %994 = vmatpush2.msra.mxu0 0.0
        %995 = vmatprep.subr.mxu0 0.0
        %996 = vmatpush2.msra.mxu0 0.0
        %997 = vmatprep.subr.mxu0 0.0
        %998 = vmatpush2.msra.mxu0 0.0
        %999 = vmatprep.subr.mxu0 0.0
        %1000 = vmatpush2.msra.mxu0 0.0
        %1001 = vmatprep.subr.mxu0 0.0
        %1002 = vmatpush2.msra.mxu0 0.0
        %1003 = vmatprep.mubr.f32.mxu0 0.0
        %1004 = vmatmul.mubr.f32.gmra.mxu0 %v442
        %v1005 = vpop.f32.mrf.mxu0
        %v1006 = vadd.f32 0.0, %v1005
        %v1007 = vpop.f32.mrf.mxu0
        %1008 = vmatprep.mubr.f32.mxu0 0.0
        %1009 = vmatmul.mubr.f32.gmra.mxu0 %v445
        %v1010 = vpop.f32.mrf.mxu0
        %v1011 = vadd.f32 0.0, %v1010
        %v1012 = vpop.f32.mrf.mxu0
        %1013 = vmatprep.mubr.f32.mxu0 0.0
        %1014 = vmatmul.mubr.f32.gmra.mxu0 %v448
        %v1015 = vpop.f32.mrf.mxu0
        %v1016 = vadd.f32 0.0, %v1015
        %v1017 = vpop.f32.mrf.mxu0
        %1018 = vmatprep.mubr.f32.mxu0 0.0
        %1019 = vmatmul.mubr.f32.gmra.mxu0 %v451
        %v1020 = vpop.f32.mrf.mxu0
        %v1021 = vadd.f32 0.0, %v1020
        %v1022 = vpop.f32.mrf.mxu0
        %1023 = vmatprep.mubr.f32.mxu0 0.0
        %1024 = vmatmul.mubr.f32.gmra.mxu0 %v454
        %v1025 = vpop.f32.mrf.mxu0
        %v1026 = vadd.f32 0.0, %v1025
        %v1027 = vpop.f32.mrf.mxu0
        %1028 = vmatprep.mubr.f32.mxu0 0.0
        %1029 = vmatmul.mubr.f32.gmra.mxu0 %v457
        %v1030 = vpop.f32.mrf.mxu0
        %v1031 = vadd.f32 0.0, %v1030
        %v1032 = vpop.f32.mrf.mxu0
        %1033 = vmatprep.mubr.f32.mxu0 0.0
        %1034 = vmatmul.mubr.f32.gmra.mxu0 %v460
        %v1035 = vpop.f32.mrf.mxu0
        %v1036 = vadd.f32 0.0, %v1035
        %v1037 = vpop.f32.mrf.mxu0
        %1038 = vmatprep.mubr.f32.mxu0 0.0
        %1039 = vmatmul.mubr.f32.gmra.mxu0 %v463
        %v1040 = vpop.f32.mrf.mxu0
        %v1041 = vadd.f32 0.0, %v1040
        %v1042 = vpop.f32.mrf.mxu0
        %1043 = vmatprep.mubr.f32.mxu0 0.0
        %1044 = vmatmul.mubr.f32.gmra.mxu0 %v466
        %v1045 = vpop.f32.mrf.mxu0
        %v1046 = vadd.f32 0.0, %v1045
        %v1047 = vpop.f32.mrf.mxu0
        %1048 = vmatprep.mubr.f32.mxu0 0.0
        %1049 = vmatmul.mubr.f32.gmra.mxu0 %v469
        %v1050 = vpop.f32.mrf.mxu0
        %v1051 = vadd.f32 0.0, %v1050
        %v1052 = vpop.f32.mrf.mxu0
        %1053 = vmatprep.mubr.f32.mxu0 0.0
        %1054 = vmatmul.mubr.f32.gmra.mxu0 %v472
        %v1055 = vpop.f32.mrf.mxu0
        %v1056 = vadd.f32 0.0, %v1055
        %v1057 = vpop.f32.mrf.mxu0
        %1058 = vmatprep.mubr.f32.mxu0 0.0
        %1059 = vmatmul.mubr.f32.gmra.mxu0 %v475
        %v1060 = vpop.f32.mrf.mxu0
        %v1061 = vadd.f32 0.0, %v1060
        %v1062 = vpop.f32.mrf.mxu0
        %1063 = vmatprep.mubr.f32.mxu0 0.0
        %1064 = vmatmul.mubr.f32.gmra.mxu0 %v478
        %v1065 = vpop.f32.mrf.mxu0
        %v1066 = vadd.f32 0.0, %v1065
        %v1067 = vpop.f32.mrf.mxu0
        %1068 = vmatprep.mubr.f32.mxu0 0.0
        %1069 = vmatmul.mubr.f32.gmra.mxu0 %v481
        %v1070 = vpop.f32.mrf.mxu0
        %v1071 = vadd.f32 0.0, %v1070
        %v1072 = vpop.f32.mrf.mxu0
        %1073 = vmatprep.mubr.f32.mxu0 0.0
        %1074 = vmatmul.mubr.f32.gmra.mxu0 %v484
        %v1075 = vpop.f32.mrf.mxu0
        %v1076 = vadd.f32 0.0, %v1075
        %v1077 = vpop.f32.mrf.mxu0
        %1078 = vmatprep.mubr.f32.mxu0 0.0
        %1079 = vmatmul.mubr.f32.gmra.mxu0 %v487
        %v1080 = vpop.f32.mrf.mxu0
        %v1081 = vadd.f32 0.0, %v1080
        %v1082 = vpop.f32.mrf.mxu0
        %1083 = vdwg.mxu0
        %1084 = vst.msk [vmem:[#allocation5] sm:$0xff] %vm416, %v1006
        %1085 = vst.msk [vmem:[#allocation5 + $0x8] sm:$0xff] %vm416, %v1011
        %1086 = vst.msk [vmem:[#allocation5 + $0x10] sm:$0xff] %vm416, %v1016
        %1087 = vst.msk [vmem:[#allocation5 + $0x18] sm:$0xff] %vm416, %v1021
        %1088 = vst.msk [vmem:[#allocation5 + $0x20] sm:$0xff] %vm416, %v1026
        %1089 = vst.msk [vmem:[#allocation5 + $0x28] sm:$0xff] %vm416, %v1031
        %1090 = vst.msk [vmem:[#allocation5 + $0x30] sm:$0xff] %vm416, %v1036
        %1091 = vst.msk [vmem:[#allocation5 + $0x38] sm:$0xff] %vm416, %v1041
        %1092 = vst.msk [vmem:[#allocation5 + $0x40] sm:$0xff] %vm416, %v1046
        %1093 = vst.msk [vmem:[#allocation5 + $0x48] sm:$0xff] %vm416, %v1051
        %1094 = vst.msk [vmem:[#allocation5 + $0x50] sm:$0xff] %vm416, %v1056
        %1095 = vst.msk [vmem:[#allocation5 + $0x58] sm:$0xff] %vm416, %v1061
        %1096 = vst.msk [vmem:[#allocation5 + $0x60] sm:$0xff] %vm416, %v1066
        %1097 = vst.msk [vmem:[#allocation5 + $0x68] sm:$0xff] %vm416, %v1071
        %1098 = vst.msk [vmem:[#allocation5 + $0x70] sm:$0xff] %vm416, %v1076
        %1099 = vst.msk [vmem:[#allocation5 + $0x78] sm:$0xff] %vm416, %v1081
        %1116 = vrot.lane.b32.xlu0 %v1006, 120
        %v1117 = vpop.permute.xlu0 %1116
        %1118 = vrot.lane.b32.xlu0 %v1011, 120
        %v1119 = vpop.permute.xlu0 %1118
        %1120 = vrot.lane.b32.xlu0 %v1016, 120
        %v1121 = vpop.permute.xlu0 %1120
        %1122 = vrot.lane.b32.xlu0 %v1021, 120
        %v1123 = vpop.permute.xlu0 %1122
        %1124 = vrot.lane.b32.xlu0 %v1026, 120
        %v1125 = vpop.permute.xlu0 %1124
        %1126 = vrot.lane.b32.xlu0 %v1031, 120
        %v1127 = vpop.permute.xlu0 %1126
        %1128 = vrot.lane.b32.xlu0 %v1036, 120
        %v1129 = vpop.permute.xlu0 %1128
        %1130 = vrot.lane.b32.xlu0 %v1041, 120
        %v1131 = vpop.permute.xlu0 %1130
        %1132 = vrot.lane.b32.xlu0 %v1046, 120
        %v1133 = vpop.permute.xlu0 %1132
        %1134 = vrot.lane.b32.xlu0 %v1051, 120
        %v1135 = vpop.permute.xlu0 %1134
        %1136 = vrot.lane.b32.xlu0 %v1056, 120
        %v1137 = vpop.permute.xlu0 %1136
        %1138 = vrot.lane.b32.xlu0 %v1061, 120
        %v1139 = vpop.permute.xlu0 %1138
        %1140 = vrot.lane.b32.xlu0 %v1066, 120
        %v1141 = vpop.permute.xlu0 %1140
        %1142 = vrot.lane.b32.xlu0 %v1071, 120
        %v1143 = vpop.permute.xlu0 %1142
        %1144 = vrot.lane.b32.xlu0 %v1076, 120
        %v1145 = vpop.permute.xlu0 %1144
        %1146 = vrot.lane.b32.xlu0 %v1081, 120
        %v1147 = vpop.permute.xlu0 %1146
        %1164 = vst.msk [vmem:[#allocation6] sm:$0xff] %vm416, %v1117
        %1165 = vst.msk [vmem:[#allocation6 + $0x8] sm:$0xff] %vm416, %v1119
        %1166 = vst.msk [vmem:[#allocation6 + $0x10] sm:$0xff] %vm416, %v1121
        %1167 = vst.msk [vmem:[#allocation6 + $0x18] sm:$0xff] %vm416, %v1123
        %1168 = vst.msk [vmem:[#allocation6 + $0x20] sm:$0xff] %vm416, %v1125
        %1169 = vst.msk [vmem:[#allocation6 + $0x28] sm:$0xff] %vm416, %v1127
        %1170 = vst.msk [vmem:[#allocation6 + $0x30] sm:$0xff] %vm416, %v1129
        %1171 = vst.msk [vmem:[#allocation6 + $0x38] sm:$0xff] %vm416, %v1131
        %1172 = vst.msk [vmem:[#allocation6 + $0x40] sm:$0xff] %vm416, %v1133
        %1173 = vst.msk [vmem:[#allocation6 + $0x48] sm:$0xff] %vm416, %v1135
        %1174 = vst.msk [vmem:[#allocation6 + $0x50] sm:$0xff] %vm416, %v1137
        %1175 = vst.msk [vmem:[#allocation6 + $0x58] sm:$0xff] %vm416, %v1139
        %1176 = vst.msk [vmem:[#allocation6 + $0x60] sm:$0xff] %vm416, %v1141
        %1177 = vst.msk [vmem:[#allocation6 + $0x68] sm:$0xff] %vm416, %v1143
        %1178 = vst.msk [vmem:[#allocation6 + $0x70] sm:$0xff] %vm416, %v1145
        %1179 = vst.msk [vmem:[#allocation6 + $0x78] sm:$0xff] %vm416, %v1147
        %v1180 = vld [vmem:[%s370] sm:$0xff]
        %v1181 = vld [vmem:[%s373] sm:$0x1]
        %v1182 = vld [vmem:[#allocation2] sm:$0xff]
        loop: start=0, step=1, limit=16
        $region49: #{mamba_scanner.1} parent=43 // loop_pre_header
          _
        $region50: #{mamba_scanner.1} parent=43 // loop_header
          %s1184 = sphi 0, %s1188
          %p1185 = scmp.ge.s32.totalorder %s1184, 16
          %v1189 = vphi %v1182, %v1542
        $region51: #{mamba_scanner.1} parent=43 // loop_header_branch
          %1187 = sbr.rel (%p1185) target = $region55
        $region52: #{mamba_scanner.1} parent=43 // loop_body
          %s1190 = smul.u32 %s1184, 8
          %s1191 = scalar_lea.vmem [#allocation4], %s1190
          %v1192 = vld [vmem:[%s1191] sm:$0xff]
          %s1193 = scalar_lea.vmem [#allocation3], %s1190
          %v1194 = vld [vmem:[%s1193] sm:$0xff]
          %s1195 = scalar_lea.vmem [#allocation5], %s1190
          %v1196 = vld [vmem:[%s1195] sm:$0xff]
          %s1197 = scalar_lea.vmem [#allocation6], %s1190
          %v1198 = vld [vmem:[%s1197] sm:$0xff]
          %v1200 = vcombine.high %v1192, %v1192
          %v1202 = vunpack.c.l.s4 1966171168
          %v1203 = vunpack.c.0.s8 %v1202
          %v1204 = vlaneseq
          %v1205 = vshrl.u32 %v1204, 7
          %v1206 = vsub.s32 %v1203, %v1205
          %v1207 = vrot.slane %v1192, %v1206
          %v1209 = vunpack.c.l.s4 1966171168
          %v1210 = vunpack.c.0.s8 %v1209
          %v1211 = vlaneseq
          %v1212 = vshrl.u32 %v1211, 7
          %v1213 = vsub.s32 %v1210, %v1212
          %v1214 = vrot.slane %v1200, %v1213
          %v1215 = vcombine.high %v1207, %v1207
          %v1216 = vcombine.high %v1214, %v1214
          %v1218 = vunpack.c.l.s4 1966171168
          %v1219 = vunpack.c.0.s8 %v1218
          %v1220 = vlaneseq
          %v1221 = vshrl.u32 %v1220, 7
          %v1222 = vsub.s32 %v1219, %v1221
          %v1223 = vrot.slane %v1207, %v1222
          %v1225 = vunpack.c.l.s4 1966171168
          %v1226 = vunpack.c.0.s8 %v1225
          %v1227 = vlaneseq
          %v1228 = vshrl.u32 %v1227, 7
          %v1229 = vsub.s32 %v1226, %v1228
          %v1230 = vrot.slane %v1214, %v1229
          %v1232 = vunpack.c.l.s4 1966171168
          %v1233 = vunpack.c.0.s8 %v1232
          %v1234 = vlaneseq
          %v1235 = vshrl.u32 %v1234, 7
          %v1236 = vsub.s32 %v1233, %v1235
          %v1237 = vrot.slane %v1215, %v1236
          %v1239 = vunpack.c.l.s4 1966171168
          %v1240 = vunpack.c.0.s8 %v1239
          %v1241 = vlaneseq
          %v1242 = vshrl.u32 %v1241, 7
          %v1243 = vsub.s32 %v1240, %v1242
          %v1244 = vrot.slane %v1216, %v1243
          %v1245 = vcombine.high %v1223, %v1223
          %v1246 = vcombine.high %v1230, %v1230
          %v1247 = vcombine.high %v1237, %v1237
          %v1248 = vcombine.high %v1244, %v1244
          %v1249 = vlaneseq
          %v1250 = vshrl.u32 %v1249, 7
          %v1251 = vsub.s32 0, %v1250
          %v1252 = vrot.slane %v1223, %v1251
          %v1253 = vlaneseq
          %v1254 = vshrl.u32 %v1253, 7
          %v1255 = vsub.s32 0, %v1254
          %v1256 = vrot.slane %v1237, %v1255
          %v1257 = vlaneseq
          %v1258 = vshrl.u32 %v1257, 7
          %v1259 = vsub.s32 0, %v1258
          %v1260 = vrot.slane %v1245, %v1259
          %v1261 = vlaneseq
          %v1262 = vshrl.u32 %v1261, 7
          %v1263 = vsub.s32 0, %v1262
          %v1264 = vrot.slane %v1247, %v1263
          %v1265 = vlaneseq
          %v1266 = vshrl.u32 %v1265, 7
          %v1267 = vsub.s32 0, %v1266
          %v1268 = vrot.slane %v1230, %v1267
          %v1269 = vlaneseq
          %v1270 = vshrl.u32 %v1269, 7
          %v1271 = vsub.s32 0, %v1270
          %v1272 = vrot.slane %v1244, %v1271
          %v1273 = vlaneseq
          %v1274 = vshrl.u32 %v1273, 7
          %v1275 = vsub.s32 0, %v1274
          %v1276 = vrot.slane %v1246, %v1275
          %v1277 = vlaneseq
          %v1278 = vshrl.u32 %v1277, 7
          %v1279 = vsub.s32 0, %v1278
          %v1280 = vrot.slane %v1248, %v1279
          %v1289 = vmul.f32 %v1252, %v1180
          %v1290 = vmul.f32 %v1256, %v1180
          %v1291 = vmul.f32 %v1260, %v1180
          %v1292 = vmul.f32 %v1264, %v1180
          %v1293 = vmul.f32 %v1268, %v1180
          %v1294 = vmul.f32 %v1272, %v1180
          %v1295 = vmul.f32 %v1276, %v1180
          %v1296 = vmul.f32 %v1280, %v1180
          %v1297 = vmul.f32 %v1289, 1.442695
          %v1298 = vpow.pop %v1297
          %v1299 = vmul.f32 %v1290, 1.442695
          %v1300 = vpow.pop %v1299
          %v1301 = vmul.f32 %v1291, 1.442695
          %v1302 = vpow.pop %v1301
          %v1303 = vmul.f32 %v1292, 1.442695
          %v1304 = vpow.pop %v1303
          %v1305 = vmul.f32 %v1293, 1.442695
          %v1306 = vpow.pop %v1305
          %v1307 = vmul.f32 %v1294, 1.442695
          %v1308 = vpow.pop %v1307
          %v1309 = vmul.f32 %v1295, 1.442695
          %v1310 = vpow.pop %v1309
          %v1311 = vmul.f32 %v1296, 1.442695
          %v1312 = vpow.pop %v1311
          %1313 = vst.msk [vmem:[#allocation7] sm:$0xff] %vm416, %v1298
          %1314 = vst.msk [vmem:[#allocation7 + $0x8] sm:$0xff] %vm416, %v1300
          %1315 = vst.msk [vmem:[#allocation7 + $0x10] sm:$0xff] %vm416, %v1302
          %1316 = vst.msk [vmem:[#allocation7 + $0x18] sm:$0xff] %vm416, %v1304
          %1317 = vst.msk [vmem:[#allocation7 + $0x20] sm:$0xff] %vm416, %v1306
          %1318 = vst.msk [vmem:[#allocation7 + $0x28] sm:$0xff] %vm416, %v1308
          %1319 = vst.msk [vmem:[#allocation7 + $0x30] sm:$0xff] %vm416, %v1310
          %1320 = vst.msk [vmem:[#allocation7 + $0x38] sm:$0xff] %vm416, %v1312
          %v1321 = vmul.f32 %v1192, %v1194
          %v1323 = vcombine.high %v1321, %v1321
          %v1325 = vunpack.c.l.s4 1966171168
          %v1326 = vunpack.c.0.s8 %v1325
          %v1327 = vlaneseq
          %v1328 = vshrl.u32 %v1327, 7
          %v1329 = vsub.s32 %v1326, %v1328
          %v1330 = vrot.slane %v1321, %v1329
          %v1332 = vunpack.c.l.s4 1966171168
          %v1333 = vunpack.c.0.s8 %v1332
          %v1334 = vlaneseq
          %v1335 = vshrl.u32 %v1334, 7
          %v1336 = vsub.s32 %v1333, %v1335
          %v1337 = vrot.slane %v1323, %v1336
          %v1338 = vcombine.high %v1330, %v1330
          %v1339 = vcombine.high %v1337, %v1337
          %v1341 = vunpack.c.l.s4 1966171168
          %v1342 = vunpack.c.0.s8 %v1341
          %v1343 = vlaneseq
          %v1344 = vshrl.u32 %v1343, 7
          %v1345 = vsub.s32 %v1342, %v1344
          %v1346 = vrot.slane %v1330, %v1345
          %v1348 = vunpack.c.l.s4 1966171168
          %v1349 = vunpack.c.0.s8 %v1348
          %v1350 = vlaneseq
          %v1351 = vshrl.u32 %v1350, 7
          %v1352 = vsub.s32 %v1349, %v1351
          %v1353 = vrot.slane %v1337, %v1352
          %v1355 = vunpack.c.l.s4 1966171168
          %v1356 = vunpack.c.0.s8 %v1355
          %v1357 = vlaneseq
          %v1358 = vshrl.u32 %v1357, 7
          %v1359 = vsub.s32 %v1356, %v1358
          %v1360 = vrot.slane %v1338, %v1359
          %v1362 = vunpack.c.l.s4 1966171168
          %v1363 = vunpack.c.0.s8 %v1362
          %v1364 = vlaneseq
          %v1365 = vshrl.u32 %v1364, 7
          %v1366 = vsub.s32 %v1363, %v1365
          %v1367 = vrot.slane %v1339, %v1366
          %v1368 = vcombine.high %v1346, %v1346
          %v1369 = vcombine.high %v1353, %v1353
          %v1370 = vcombine.high %v1360, %v1360
          %v1371 = vcombine.high %v1367, %v1367
          %v1372 = vlaneseq
          %v1373 = vshrl.u32 %v1372, 7
          %v1374 = vsub.s32 0, %v1373
          %v1375 = vrot.slane %v1196, %v1374
          %1377 = vbcast.lane.b32.xlu0 %v1375, 256
          %v1378 = vpop.permute.xlu0 %1377
          %v1379 = vlaneseq
          %v1380 = vshrl.u32 %v1379, 7
          %v1381 = vsub.s32 1, %v1380
          %v1382 = vrot.slane %v1196, %v1381
          %1384 = vbcast.lane.b32.xlu0 %v1382, 256
          %v1385 = vpop.permute.xlu0 %1384
          %v1386 = vlaneseq
          %v1387 = vshrl.u32 %v1386, 7
          %v1388 = vsub.s32 2, %v1387
          %v1389 = vrot.slane %v1196, %v1388
          %1391 = vbcast.lane.b32.xlu0 %v1389, 256
          %v1392 = vpop.permute.xlu0 %1391
          %v1393 = vlaneseq
          %v1394 = vshrl.u32 %v1393, 7
          %v1395 = vsub.s32 3, %v1394
          %v1396 = vrot.slane %v1196, %v1395
          %1398 = vbcast.lane.b32.xlu0 %v1396, 256
          %v1399 = vpop.permute.xlu0 %1398
          %v1400 = vlaneseq
          %v1401 = vshrl.u32 %v1400, 7
          %v1402 = vsub.s32 4, %v1401
          %v1403 = vrot.slane %v1196, %v1402
          %1405 = vbcast.lane.b32.xlu0 %v1403, 256
          %v1406 = vpop.permute.xlu0 %1405
          %v1407 = vlaneseq
          %v1408 = vshrl.u32 %v1407, 7
          %v1409 = vsub.s32 5, %v1408
          %v1410 = vrot.slane %v1196, %v1409
          %1412 = vbcast.lane.b32.xlu0 %v1410, 256
          %v1413 = vpop.permute.xlu0 %1412
          %v1414 = vlaneseq
          %v1415 = vshrl.u32 %v1414, 7
          %v1416 = vsub.s32 6, %v1415
          %v1417 = vrot.slane %v1196, %v1416
          %1419 = vbcast.lane.b32.xlu0 %v1417, 256
          %v1420 = vpop.permute.xlu0 %1419
          %v1421 = vlaneseq
          %v1422 = vshrl.u32 %v1421, 7
          %v1423 = vsub.s32 7, %v1422
          %v1424 = vrot.slane %v1196, %v1423
          %1426 = vbcast.lane.b32.xlu0 %v1424, 256
          %v1427 = vpop.permute.xlu0 %1426
          %v1428 = vlaneseq
          %v1429 = vshrl.u32 %v1428, 7
          %v1430 = vsub.s32 0, %v1429
          %v1431 = vrot.slane %v1346, %v1430
          %v1432 = vlaneseq
          %v1433 = vshrl.u32 %v1432, 7
          %v1434 = vsub.s32 0, %v1433
          %v1435 = vrot.slane %v1360, %v1434
          %v1436 = vlaneseq
          %v1437 = vshrl.u32 %v1436, 7
          %v1438 = vsub.s32 0, %v1437
          %v1439 = vrot.slane %v1368, %v1438
          %v1440 = vlaneseq
          %v1441 = vshrl.u32 %v1440, 7
          %v1442 = vsub.s32 0, %v1441
          %v1443 = vrot.slane %v1370, %v1442
          %v1444 = vlaneseq
          %v1445 = vshrl.u32 %v1444, 7
          %v1446 = vsub.s32 0, %v1445
          %v1447 = vrot.slane %v1353, %v1446
          %v1448 = vlaneseq
          %v1449 = vshrl.u32 %v1448, 7
          %v1450 = vsub.s32 0, %v1449
          %v1451 = vrot.slane %v1367, %v1450
          %v1452 = vlaneseq
          %v1453 = vshrl.u32 %v1452, 7
          %v1454 = vsub.s32 0, %v1453
          %v1455 = vrot.slane %v1369, %v1454
          %v1456 = vlaneseq
          %v1457 = vshrl.u32 %v1456, 7
          %v1458 = vsub.s32 0, %v1457
          %v1459 = vrot.slane %v1371, %v1458
          %v1468 = vmul.f32 %v1431, %v1378
          %v1469 = vmul.f32 %v1435, %v1385
          %v1470 = vmul.f32 %v1439, %v1392
          %v1471 = vmul.f32 %v1443, %v1399
          %v1472 = vmul.f32 %v1447, %v1406
          %v1473 = vmul.f32 %v1451, %v1413
          %v1474 = vmul.f32 %v1455, %v1420
          %v1475 = vmul.f32 %v1459, %v1427
          %1476 = vst.msk [vmem:[#allocation8] sm:$0xff] %vm416, %v1468
          %1477 = vst.msk [vmem:[#allocation8 + $0x8] sm:$0xff] %vm416, %v1469
          %1478 = vst.msk [vmem:[#allocation8 + $0x10] sm:$0xff] %vm416, %v1470
          %1479 = vst.msk [vmem:[#allocation8 + $0x18] sm:$0xff] %vm416, %v1471
          %1480 = vst.msk [vmem:[#allocation8 + $0x20] sm:$0xff] %vm416, %v1472
          %1481 = vst.msk [vmem:[#allocation8 + $0x28] sm:$0xff] %vm416, %v1473
          %1482 = vst.msk [vmem:[#allocation8 + $0x30] sm:$0xff] %vm416, %v1474
          %1483 = vst.msk [vmem:[#allocation8 + $0x38] sm:$0xff] %vm416, %v1475
          %v1484 = vld [vmem:[#allocation7] sm:$0xff]
          %v1485 = vmul.f32 %v1484, %v1189
          %v1486 = vld [vmem:[#allocation8] sm:$0xff]
          %v1487 = vadd.f32 %v1485, %v1486
          %1488 = vst.msk [vmem:[#allocation9] sm:$0xff] %vm416, %v1487
          %s1489 = scalar_lea.vmem [#allocation7], 8
          %v1490 = vld [vmem:[%s1489] sm:$0xff]
          %v1491 = vmul.f32 %v1490, %v1487
          %s1492 = scalar_lea.vmem [#allocation8], 8
          %v1493 = vld [vmem:[%s1492] sm:$0xff]
          %v1494 = vadd.f32 %v1491, %v1493
          %s1495 = scalar_lea.vmem [#allocation9], 8
          %1496 = vst.msk [vmem:[%s1495] sm:$0xff] %vm416, %v1494
          %s1497 = scalar_lea.vmem [#allocation7], 16
          %v1498 = vld [vmem:[%s1497] sm:$0xff]
          %v1499 = vmul.f32 %v1498, %v1494
          %s1500 = scalar_lea.vmem [#allocation8], 16
          %v1501 = vld [vmem:[%s1500] sm:$0xff]
          %v1502 = vadd.f32 %v1499, %v1501
          %s1503 = scalar_lea.vmem [#allocation9], 16
          %1504 = vst.msk [vmem:[%s1503] sm:$0xff] %vm416, %v1502
          %s1505 = scalar_lea.vmem [#allocation7], 24
          %v1506 = vld [vmem:[%s1505] sm:$0xff]
          %v1507 = vmul.f32 %v1506, %v1502
          %s1508 = scalar_lea.vmem [#allocation8], 24
          %v1509 = vld [vmem:[%s1508] sm:$0xff]
          %v1510 = vadd.f32 %v1507, %v1509
          %s1511 = scalar_lea.vmem [#allocation9], 24
          %1512 = vst.msk [vmem:[%s1511] sm:$0xff] %vm416, %v1510
          %s1513 = scalar_lea.vmem [#allocation7], 32
          %v1514 = vld [vmem:[%s1513] sm:$0xff]
          %v1515 = vmul.f32 %v1514, %v1510
          %s1516 = scalar_lea.vmem [#allocation8], 32
          %v1517 = vld [vmem:[%s1516] sm:$0xff]
          %v1518 = vadd.f32 %v1515, %v1517
          %s1519 = scalar_lea.vmem [#allocation9], 32
          %1520 = vst.msk [vmem:[%s1519] sm:$0xff] %vm416, %v1518
          %s1521 = scalar_lea.vmem [#allocation7], 40
          %v1522 = vld [vmem:[%s1521] sm:$0xff]
          %v1523 = vmul.f32 %v1522, %v1518
          %s1524 = scalar_lea.vmem [#allocation8], 40
          %v1525 = vld [vmem:[%s1524] sm:$0xff]
          %v1526 = vadd.f32 %v1523, %v1525
          %s1527 = scalar_lea.vmem [#allocation9], 40
          %1528 = vst.msk [vmem:[%s1527] sm:$0xff] %vm416, %v1526
          %s1529 = scalar_lea.vmem [#allocation7], 48
          %v1530 = vld [vmem:[%s1529] sm:$0xff]
          %v1531 = vmul.f32 %v1530, %v1526
          %s1532 = scalar_lea.vmem [#allocation8], 48
          %v1533 = vld [vmem:[%s1532] sm:$0xff]
          %v1534 = vadd.f32 %v1531, %v1533
          %s1535 = scalar_lea.vmem [#allocation9], 48
          %1536 = vst.msk [vmem:[%s1535] sm:$0xff] %vm416, %v1534
          %s1537 = scalar_lea.vmem [#allocation7], 56
          %v1538 = vld [vmem:[%s1537] sm:$0xff]
          %v1539 = vmul.f32 %v1538, %v1534
          %s1540 = scalar_lea.vmem [#allocation8], 56
          %v1541 = vld [vmem:[%s1540] sm:$0xff]
          %v1542 = vadd.f32 %v1539, %v1541
          %s1543 = scalar_lea.vmem [#allocation9], 56
          %1544 = vst.msk [vmem:[%s1543] sm:$0xff] %vm416, %v1542
          %v1545 = vld [vmem:[#allocation9] sm:$0xff]
          %v1546 = vld [vmem:[#allocation9 + $0x8] sm:$0xff]
          %v1547 = vld [vmem:[#allocation9 + $0x10] sm:$0xff]
          %v1548 = vld [vmem:[#allocation9 + $0x18] sm:$0xff]
          %v1549 = vld [vmem:[#allocation9 + $0x20] sm:$0xff]
          %v1550 = vld [vmem:[#allocation9 + $0x28] sm:$0xff]
          %v1551 = vld [vmem:[#allocation9 + $0x30] sm:$0xff]
          %v1552 = vld [vmem:[#allocation9 + $0x38] sm:$0xff]
          %v1553 = vlaneseq
          %v1554 = vshrl.u32 %v1553, 7
          %v1555 = vsub.s32 0, %v1554
          %v1556 = vrot.slane %v1198, %v1555
          %1558 = vbcast.lane.b32.xlu0 %v1556, 256
          %v1559 = vpop.permute.xlu0 %1558
          %v1560 = vlaneseq
          %v1561 = vshrl.u32 %v1560, 7
          %v1562 = vsub.s32 1, %v1561
          %v1563 = vrot.slane %v1198, %v1562
          %1565 = vbcast.lane.b32.xlu0 %v1563, 256
          %v1566 = vpop.permute.xlu0 %1565
          %v1567 = vlaneseq
          %v1568 = vshrl.u32 %v1567, 7
          %v1569 = vsub.s32 2, %v1568
          %v1570 = vrot.slane %v1198, %v1569
          %1572 = vbcast.lane.b32.xlu0 %v1570, 256
          %v1573 = vpop.permute.xlu0 %1572
          %v1574 = vlaneseq
          %v1575 = vshrl.u32 %v1574, 7
          %v1576 = vsub.s32 3, %v1575
          %v1577 = vrot.slane %v1198, %v1576
          %1579 = vbcast.lane.b32.xlu0 %v1577, 256
          %v1580 = vpop.permute.xlu0 %1579
          %v1581 = vlaneseq
          %v1582 = vshrl.u32 %v1581, 7
          %v1583 = vsub.s32 4, %v1582
          %v1584 = vrot.slane %v1198, %v1583
          %1586 = vbcast.lane.b32.xlu0 %v1584, 256
          %v1587 = vpop.permute.xlu0 %1586
          %v1588 = vlaneseq
          %v1589 = vshrl.u32 %v1588, 7
          %v1590 = vsub.s32 5, %v1589
          %v1591 = vrot.slane %v1198, %v1590
          %1593 = vbcast.lane.b32.xlu0 %v1591, 256
          %v1594 = vpop.permute.xlu0 %1593
          %v1595 = vlaneseq
          %v1596 = vshrl.u32 %v1595, 7
          %v1597 = vsub.s32 6, %v1596
          %v1598 = vrot.slane %v1198, %v1597
          %1600 = vbcast.lane.b32.xlu0 %v1598, 256
          %v1601 = vpop.permute.xlu0 %1600
          %v1602 = vlaneseq
          %v1603 = vshrl.u32 %v1602, 7
          %v1604 = vsub.s32 7, %v1603
          %v1605 = vrot.slane %v1198, %v1604
          %1607 = vbcast.lane.b32.xlu0 %v1605, 256
          %v1608 = vpop.permute.xlu0 %1607
          %v1609 = vmul.f32 %v1545, %v1559
          %v1610 = vmul.f32 %v1546, %v1566
          %v1611 = vmul.f32 %v1547, %v1573
          %v1612 = vmul.f32 %v1548, %v1580
          %v1613 = vmul.f32 %v1549, %v1587
          %v1614 = vmul.f32 %v1550, %v1594
          %v1615 = vmul.f32 %v1551, %v1601
          %v1616 = vmul.f32 %v1552, %v1608
          %v1617 = vsel %vm416, %v1609, 0.0
          %v1618 = vrot.slane %v1617, 4
          %v1619 = vadd.f32 %v1617, %v1618
          %v1620 = vrot.slane %v1619, 2
          %v1621 = vadd.f32 %v1619, %v1620
          %v1622 = vrot.slane %v1621, 1
          %v1623 = vadd.f32 %v1621, %v1622
          %v1624 = vsel %vm416, %v1610, 0.0
          %v1625 = vrot.slane %v1624, 4
          %v1626 = vadd.f32 %v1624, %v1625
          %v1627 = vrot.slane %v1626, 2
          %v1628 = vadd.f32 %v1626, %v1627
          %v1629 = vrot.slane %v1628, 1
          %v1630 = vadd.f32 %v1628, %v1629
          %v1631 = vsel %vm416, %v1611, 0.0
          %v1632 = vrot.slane %v1631, 4
          %v1633 = vadd.f32 %v1631, %v1632
          %v1634 = vrot.slane %v1633, 2
          %v1635 = vadd.f32 %v1633, %v1634
          %v1636 = vrot.slane %v1635, 1
          %v1637 = vadd.f32 %v1635, %v1636
          %v1638 = vsel %vm416, %v1612, 0.0
          %v1639 = vrot.slane %v1638, 4
          %v1640 = vadd.f32 %v1638, %v1639
          %v1641 = vrot.slane %v1640, 2
          %v1642 = vadd.f32 %v1640, %v1641
          %v1643 = vrot.slane %v1642, 1
          %v1644 = vadd.f32 %v1642, %v1643
          %v1645 = vsel %vm416, %v1613, 0.0
          %v1646 = vrot.slane %v1645, 4
          %v1647 = vadd.f32 %v1645, %v1646
          %v1648 = vrot.slane %v1647, 2
          %v1649 = vadd.f32 %v1647, %v1648
          %v1650 = vrot.slane %v1649, 1
          %v1651 = vadd.f32 %v1649, %v1650
          %v1652 = vsel %vm416, %v1614, 0.0
          %v1653 = vrot.slane %v1652, 4
          %v1654 = vadd.f32 %v1652, %v1653
          %v1655 = vrot.slane %v1654, 2
          %v1656 = vadd.f32 %v1654, %v1655
          %v1657 = vrot.slane %v1656, 1
          %v1658 = vadd.f32 %v1656, %v1657
          %v1659 = vsel %vm416, %v1615, 0.0
          %v1660 = vrot.slane %v1659, 4
          %v1661 = vadd.f32 %v1659, %v1660
          %v1662 = vrot.slane %v1661, 2
          %v1663 = vadd.f32 %v1661, %v1662
          %v1664 = vrot.slane %v1663, 1
          %v1665 = vadd.f32 %v1663, %v1664
          %v1666 = vsel %vm416, %v1616, 0.0
          %v1667 = vrot.slane %v1666, 4
          %v1668 = vadd.f32 %v1666, %v1667
          %v1669 = vrot.slane %v1668, 2
          %v1670 = vadd.f32 %v1668, %v1669
          %v1671 = vrot.slane %v1670, 1
          %v1672 = vadd.f32 %v1670, %v1671
          %v1674 = vlaneseq
          %v1675 = vshrl.u32 %v1674, 7
          %v1676 = vsub.s32 0, %v1675
          %v1677 = vrot.slane %v1181, %v1676
          %v1679 = vmul.f32 %v1677, %v1194
          %v1681 = vrot.slane %v1679, 1
          %v1682 = vrot.slane %v1679, 2
          %v1683 = vrot.slane %v1679, 3
          %v1684 = vrot.slane %v1679, 4
          %v1685 = vrot.slane %v1679, 5
          %v1686 = vrot.slane %v1679, 6
          %v1687 = vrot.slane %v1679, 7
          %v1696 = vadd.f32 %v1623, %v1679
          %v1697 = vadd.f32 %v1630, %v1681
          %v1698 = vadd.f32 %v1637, %v1682
          %v1699 = vadd.f32 %v1644, %v1683
          %v1700 = vadd.f32 %v1651, %v1684
          %v1701 = vadd.f32 %v1658, %v1685
          %v1702 = vadd.f32 %v1665, %v1686
          %v1703 = vadd.f32 %v1672, %v1687
          %v1712 = vrot.slane %v1697, 7
          %vm1713 = vcmask 1041409
          %v1714 = vsel %vm1713, %v1712, %v1696
          %v1715 = vrot.slane %v1698, 6
          %vm1716 = vcmask 1042434
          %v1717 = vsel %vm1716, %v1715, %v1714
          %v1718 = vrot.slane %v1699, 5
          %vm1719 = vcmask 1043459
          %v1720 = vsel %vm1719, %v1718, %v1717
          %v1721 = vrot.slane %v1700, 4
          %vm1722 = vcmask 1044484
          %v1723 = vsel %vm1722, %v1721, %v1720
          %v1724 = vrot.slane %v1701, 3
          %vm1725 = vcmask 1045509
          %v1726 = vsel %vm1725, %v1724, %v1723
          %v1727 = vrot.slane %v1702, 2
          %vm1728 = vcmask 1046534
          %v1729 = vsel %vm1728, %v1727, %v1726
          %v1730 = vrot.slane %v1703, 1
          %vm1731 = vcmask 1047559
          %v1732 = vsel %vm1731, %v1730, %v1729
          %1734 = vst.msk [vmem:[%s1191] sm:$0xff] %vm416, %v1732
        $region53: #{mamba_scanner.1} parent=43 // loop_footer
          %s1188 = sadd.s32 1, %s1184
        $region54: #{mamba_scanner.1} parent=43 // loop_footer_branch
          %1183 = sbr.rel target = $region50
        $region55: #{mamba_scanner.1} parent=43 // loop_exit
          _
        %1735 = vst.msk [vmem:[#allocation2] sm:$0xff] %vm416, %v1189
        %v1736 = vld [vmem:[#allocation4] sm:$0xff]
        %v1737 = vld [vmem:[#allocation4 + $0x8] sm:$0xff]
        %v1738 = vld [vmem:[#allocation4 + $0x10] sm:$0xff]
        %v1739 = vld [vmem:[#allocation4 + $0x18] sm:$0xff]
        %v1740 = vld [vmem:[#allocation4 + $0x20] sm:$0xff]
        %v1741 = vld [vmem:[#allocation4 + $0x28] sm:$0xff]
        %v1742 = vld [vmem:[#allocation4 + $0x30] sm:$0xff]
        %v1743 = vld [vmem:[#allocation4 + $0x38] sm:$0xff]
        %v1744 = vld [vmem:[#allocation4 + $0x40] sm:$0xff]
        %v1745 = vld [vmem:[#allocation4 + $0x48] sm:$0xff]
        %v1746 = vld [vmem:[#allocation4 + $0x50] sm:$0xff]
        %v1747 = vld [vmem:[#allocation4 + $0x58] sm:$0xff]
        %v1748 = vld [vmem:[#allocation4 + $0x60] sm:$0xff]
        %v1749 = vld [vmem:[#allocation4 + $0x68] sm:$0xff]
        %v1750 = vld [vmem:[#allocation4 + $0x70] sm:$0xff]
        %v1751 = vld [vmem:[#allocation4 + $0x78] sm:$0xff]
        %1752 = vxpose.xlu0.b32.start [1/16] %v1736, 128
        %1753 = vxpose.xlu0.b32.cont [2/16] %v1737, 128
        %1754 = vxpose.xlu0.b32.cont [3/16] %v1738, 128
        %1755 = vxpose.xlu0.b32.cont [4/16] %v1739, 128
        %1756 = vxpose.xlu0.b32.cont [5/16] %v1740, 128
        %1757 = vxpose.xlu0.b32.cont [6/16] %v1741, 128
        %1758 = vxpose.xlu0.b32.cont [7/16] %v1742, 128
        %1759 = vxpose.xlu0.b32.cont [8/16] %v1743, 128
        %1760 = vxpose.xlu0.b32.cont [9/16] %v1744, 128
        %1761 = vxpose.xlu0.b32.cont [10/16] %v1745, 128
        %1762 = vxpose.xlu0.b32.cont [11/16] %v1746, 128
        %1763 = vxpose.xlu0.b32.cont [12/16] %v1747, 128
        %1764 = vxpose.xlu0.b32.cont [13/16] %v1748, 128
        %1765 = vxpose.xlu0.b32.cont [14/16] %v1749, 128
        %1766 = vxpose.xlu0.b32.cont [15/16] %v1750, 128
        %1767 = vxpose.xlu0.b32.end [16/16] %v1751, 128
        %v1768 = vpop.trf.xlu0
        %v1769 = vpop.trf.xlu0
        %v1770 = vpop.trf.xlu0
        %v1771 = vpop.trf.xlu0
        %v1772 = vpop.trf.xlu0
        %v1773 = vpop.trf.xlu0
        %v1774 = vpop.trf.xlu0
        %v1775 = vpop.trf.xlu0
        %v1776 = vpop.trf.xlu0
        %v1777 = vpop.trf.xlu0
        %v1778 = vpop.trf.xlu0
        %v1779 = vpop.trf.xlu0
        %v1780 = vpop.trf.xlu0
        %v1781 = vpop.trf.xlu0
        %v1782 = vpop.trf.xlu0
        %v1783 = vpop.trf.xlu0
        %1784 = vst [vmem:[%s346] sm:$0xff] %v1768
        %s1785 = sand.u32 %s211, 1
        %s1786 = scalar_lea.sflag [#allocation11], %s1785
        %s1787 = sand.u32 %s211, 1
        %s1788 = smul.addr %s1787, 8
        %s1789 = scalar_lea.vmem [#allocation10], %s1788
        // Predicated region
        $region56: #{mamba_scanner.1} parent=43 // pred_check
          %p1790 = pneg %p221
        $region57: #{mamba_scanner.1} parent=43 // pred_check_branch
          %1792 = sbr.rel (%p1790) target = $region59
        $region58: #{mamba_scanner.1} parent=43 // pred_region
          %s1794 = ssub.s32 128, 128
          %1795 = vsyncadd %s1786, %s1794
          %s1796 = smul.addr %s25, 2
          %s1797 = sadd.s32 %s27, %s1796
          %s1798 = smul.addr %s26, 8
          %s1799 = sadd.s32 %s1797, %s1798
          %s1800 = smul.addr %s1799, 128
          %s1801 = scalar_lea.hbm %s6, %s1800
          %s1803 = sshll.u32 %s1789, 4
          %s1804 = int_to_ptr.vmem [resolvable:$true] %s1803
          %1806 = dma.vmem_to_hbm [thread:$0]  %s1804, 128, %s1801, %s1786
        $region59: #{mamba_scanner.1} parent=43 // pred_fallthru
          _
      $region44: #{mamba_scanner.1} parent=5 // pred_fallthru
        _
      %p1807 = scmp.le.s32.totalorder 2, %s15
      // Predicated region
      $region60: #{mamba_scanner.1} parent=5 // pred_check
        %p1808 = pneg %p1807
      $region61: #{mamba_scanner.1} parent=5 // pred_check_branch
        %1810 = sbr.rel (%p1808) target = $region63
      $region62: #{mamba_scanner.1} parent=5 // pred_region
        %s1811 = ssub.s32 %s15, 2
        // Predicated region
        $region64: #{mamba_scanner.1} parent=62 // pred_check
          %p1812 = pneg %p227
        $region65: #{mamba_scanner.1} parent=62 // pred_check_branch
          %1814 = sbr.rel (%p1812) target = $region67
        $region66: #{mamba_scanner.1} parent=62 // pred_region
          %s1815 = sand.u32 %s212, 1
          %s1816 = scalar_lea.sflag [#allocation11], %s1815
          %s1817 = sand.u32 %s212, 1
          %s1818 = smul.addr %s1817, 8
          %s1819 = scalar_lea.vmem [#allocation10], %s1818
          %1820 = dma.done %s1816, 128
        $region67: #{mamba_scanner.1} parent=62 // pred_fallthru
          _
      $region63: #{mamba_scanner.1} parent=5 // pred_fallthru
        _
    $region6: #{mamba_scanner.1} parent=1 // loop_footer
      %s19 = sadd.s32 1, %s15
    $region7: #{mamba_scanner.1} parent=1 // loop_footer_branch
      %14 = sbr.rel target = $region3
    $region8: #{mamba_scanner.1} parent=1 // loop_exit
      _
    %1821 = vsyncpa [#allocation11], 1
    %s1822 = scalar_lea.sflag [#allocation11], 1
    %1823 = vsyncpa %s1822, 1

</llo_original>
